<compile_context>
chip_gen: v7x
topology: tpu7x:2x2x1
jax: 0.10.0
libtpu: 0.0.40
codegen_flags: <defaults>
</compile_context>

<pallas_src>
import functools

import jax
import jax.numpy as jnp
import numpy as np
from jax import lax
from jax.experimental import pallas as pl
from jax.experimental.pallas import tpu as pltpu

EPS = 1e-5


def _double_conv_kernel(x_ref, w1b_ref, w2b_ref, g1_ref, be1_ref, g2_ref, be2_ref,
                        p_ref, pt_ref, out_ref, pad1_ref, pad2_ref,
                        *, N, H, W, Cin, Cout):
    # x_ref   : (N*H, W*Cin)        bf16, packed rows (lane = x*Cin + c)
    # w1b_ref : (3*W*Cin,  W*Cout)  bf16 banded weights (one (W*Cin, W*Cout) block per dy)
    # w2b_ref : (3*W*Cout, W*Cout)  f32  banded weights for conv2
    # g*/be*  : (1, Cout)           f32 BatchNorm affine params
    # p_ref   : (W*Cout, Cout)      f32 0/1 "fold W lane-groups -> channel" matrix
    # pt_ref  : (Cout, W*Cout)      f32 0/1 "broadcast channel -> packed lanes" matrix
    # out_ref : (N*H, W*Cout)       bf16, lane-dense packed output
    # pad1_ref: (N*(H+2), W*Cin)    bf16 scratch (H-padded packed input)
    # pad2_ref: (N*(H+2), W*Cout)   f32  scratch (H-padded conv1 activation)
    L1 = W * Cin     # packed lane width of conv-1 input rows
    L2 = W * Cout    # packed lane width of conv-1/-2 output rows
    Hp = H + 2       # rows per image in the H-padded scratches

    # ---- stage packed input; zero ONLY the two halo rows per image (no width halo) ----
    for n in range(N):
        pad1_ref[pl.ds(n * Hp, 1), :] = jnp.zeros((1, L1), pad1_ref.dtype)
        pad1_ref[pl.ds(n * Hp + H + 1, 1), :] = jnp.zeros((1, L1), pad1_ref.dtype)
        pad1_ref[pl.ds(n * Hp + 1, H), :] = x_ref[pl.ds(n * H, H), :]
        pad2_ref[pl.ds(n * Hp, 1), :] = jnp.zeros((1, L2), pad2_ref.dtype)
        pad2_ref[pl.ds(n * Hp + H + 1, 1), :] = jnp.zeros((1, L2), pad2_ref.dtype)

    def conv(pad_ref, wb_ref, K):
        # 3 row-shifted matmuls per image against the (K, L2) banded weights:
        # the whole 3x3 conv (incl. width padding) is MXU work with a full
        # 128-lane output; no gathers, no concat, no lane-narrow intermediates.
        accs = []
        for n in range(N):
            a = jnp.zeros((H, L2), jnp.float32)
            for dy in range(3):
                lhs = pad_ref[pl.ds(n * Hp + dy, H), :]          # (H, K)
                rhs = wb_ref[pl.ds(dy * K, K), :]                # (K, L2)
                a = a + jnp.dot(lhs, rhs, preferred_element_type=jnp.float32)
            accs.append(a)
        return accs

    def bn_relu(accs, g_ref, be_ref):
        # one-pass sum / sum-of-squares batch statistics, all in f32, all lane-dense
        s1 = jnp.zeros((1, L2), jnp.float32)
        s2 = jnp.zeros((1, L2), jnp.float32)
        for a in accs:
            s1 = s1 + jnp.sum(a, axis=0, keepdims=True)
            s2 = s2 + jnp.sum(a * a, axis=0, keepdims=True)
        # fold the W lane-groups into per-channel sums with a tiny constant matmul
        s1c = jnp.dot(s1, p_ref[...], preferred_element_type=jnp.float32)     # (1, Cout)
        s2c = jnp.dot(s2, p_ref[...], preferred_element_type=jnp.float32)     # (1, Cout)
        inv_cnt = 1.0 / float(N * H * W)
        mean = s1c * inv_cnt
        var = s2c * inv_cnt - mean * mean        # f32 throughout: no bf16 cancellation
        inv = lax.rsqrt(var + EPS)
        scale_c = g_ref[...] * inv                                            # (1, Cout)
        shift_c = be_ref[...] - mean * scale_c                                # (1, Cout)
        # broadcast per-channel scale/shift back onto the packed (x, c) lane layout
        scale_l = jnp.dot(scale_c, pt_ref[...], preferred_element_type=jnp.float32)
        shift_l = jnp.dot(shift_c, pt_ref[...], preferred_element_type=jnp.float32)
        return [jnp.maximum(a * scale_l + shift_l, 0.0) for a in accs]

    # ---- conv1 (bf16 MXU, f32 acc) -> BN -> ReLU; keep activation f32 (no round trip) ----
    y1 = bn_relu(conv(pad1_ref, w1b_ref, L1), g1_ref, be1_ref)
    for n in range(N):
        pad2_ref[pl.ds(n * Hp + 1, H), :] = y1[n]

    # ---- conv2 (f32) -> BN -> ReLU -> lane-dense bf16 output ----
    y2 = bn_relu(conv(pad2_ref, w2b_ref, L2), g2_ref, be2_ref)
    for n in range(N):
        out_ref[pl.ds(n * H, H), :] = y2[n].astype(out_ref.dtype)


def _band_weights(w, W):
    """(O, I, 3, 3) OIHW conv weights -> (3*W*I, W*O) banded matrices.

    One (W*I, W*O) block per vertical tap dy. Row index = xin*I + c (packed input lane),
    column index = x*O + o (packed output lane). The width-direction zero padding is
    folded into the band structure, so no width halo is ever materialized.
    """
    O, I = int(w.shape[0]), int(w.shape[1])
    wk = jnp.transpose(w, (2, 3, 1, 0))                    # (dy, dx, c, o)
    sel = np.zeros((3, W, W), np.float32)                  # sel[dx, xin, x] = [xin == x+dx-1]
    for dx in range(3):
        for x in range(W):
            xin = x + dx - 1
            if 0 <= xin < W:
                sel[dx, xin, x] = 1.0
    band = jnp.einsum('dix,ydco->yicxo', jnp.asarray(sel), wk)   # (3, W, I, W, O)
    return band.reshape(3 * W * I, W * O)


def double_conv(x_nchw, w1, b1, g1, be1, w2, b2, g2, be2):
    """x: (N, Cin, H, W); w1: (Cout, Cin, 3, 3); w2: (Cout, Cout, 3, 3).

    b1/b2 are accepted for API parity with nn.Conv2d but unused: with batch-statistics
    BatchNorm directly after each conv, the per-channel bias is cancelled exactly by the
    mean subtraction.
    """
    del b1, b2
    N, Cin, H, W = map(int, x_nchw.shape)
    Cout = int(w1.shape[0])
    L1, L2 = W * Cin, W * Cout

    # NCHW -> packed lane-dense rows (N*H, W*Cin), bf16 for the MXU.
    x_p = jnp.transpose(x_nchw, (0, 2, 3, 1)).reshape(N * H, L1).astype(jnp.bfloat16)

    w1b = _band_weights(w1, W).astype(jnp.bfloat16)        # (3*L1, L2) bf16 (MXU-native)
    w2b = _band_weights(w2, W).astype(jnp.float32)         # (3*L2, L2) f32 (conv2 path)

    # constant 0/1 fold / broadcast matrices for BatchNorm in the packed layout
    p_np = np.tile(np.eye(Cout, dtype=np.float32), (W, 1))         # (L2, Cout)
    p = jnp.asarray(p_np)
    pt = jnp.asarray(np.ascontiguousarray(p_np.T))                 # (Cout, L2)

    def row(v):
        return jnp.asarray(v, jnp.float32).reshape(1, Cout)

    kernel = functools.partial(_double_conv_kernel, N=N, H=H, W=W, Cin=Cin, Cout=Cout)

    # VMEM budget computed from actual buffer sizes (+ headroom), not a blanket constant.
    def nbytes(shape, dt):
        return int(np.prod(shape)) * jnp.dtype(dt).itemsize

    buf_bytes = (nbytes((N * H, L1), jnp.bfloat16)
                 + nbytes((3 * L1, L2), jnp.bfloat16)
                 + nbytes((3 * L2, L2), jnp.float32)
                 + 4 * nbytes((1, Cout), jnp.float32)
                 + nbytes((L2, Cout), jnp.float32) + nbytes((Cout, L2), jnp.float32)
                 + nbytes((N * H, L2), jnp.bfloat16)
                 + nbytes((N * (H + 2), L1), jnp.bfloat16)
                 + nbytes((N * (H + 2), L2), jnp.float32))
    vmem_bytes = max(2 * buf_bytes + (2 << 20), 8 << 20)

    vmem = pl.BlockSpec(memory_space=pltpu.MemorySpace.VMEM)
    out = pl.pallas_call(
        kernel,
        out_shape=jax.ShapeDtypeStruct((N * H, L2), jnp.bfloat16),
        in_specs=[vmem] * 9,
        out_specs=vmem,
        scratch_shapes=[pltpu.VMEM((N * (H + 2), L1), jnp.bfloat16),
                        pltpu.VMEM((N * (H + 2), L2), jnp.float32)],
        compiler_params=pltpu.CompilerParams(vmem_limit_bytes=int(vmem_bytes)),
    )(x_p, w1b, w2b, row(g1), row(be1), row(g2), row(be2), p, pt)

    # packed (N*H, W*Cout) bf16 -> NCHW f32
    return jnp.transpose(out.reshape(N, H, W, Cout), (0, 3, 1, 2)).astype(jnp.float32)


def ref_double_conv(x, w1, b1, g1, be1, w2, b2, g2, be2):
    """Pure-JAX f32 reference (NCHW), same semantics as the PyTorch module in train mode."""
    def conv(x, w, b):
        y = jax.lax.conv_general_dilated(
            x, w, window_strides=(1, 1), padding=((1, 1), (1, 1)),
            dimension_numbers=('NCHW', 'OIHW', 'NCHW'))
        return y + b[None, :, None, None]

    def bn_relu(x, g, be):
        mean = jnp.mean(x, axis=(0, 2, 3), keepdims=True)
        var = jnp.mean((x - mean) ** 2, axis=(0, 2, 3), keepdims=True)
        y = (x - mean) * jax.lax.rsqrt(var + EPS)
        y = y * g[None, :, None, None] + be[None, :, None, None]
        return jnp.maximum(y, 0.0)

    h = bn_relu(conv(x, w1, b1), g1, be1)
    return bn_relu(conv(h, w2, b2), g2, be2)


if __name__ == "__main__":
    N, Cin, Cout, H, W = 2, 4, 8, 16, 16

    key = jax.random.PRNGKey(0)
    kx, kw1, kb1, kw2, kb2 = jax.random.split(key, 5)

    x = jax.random.normal(kx, (N, Cin, H, W), jnp.float32)

    w1 = jax.random.normal(kw1, (Cout, Cin, 3, 3), jnp.float32) * 0.1
    b1 = jax.random.normal(kb1, (Cout,), jnp.float32) * 0.1
    w2 = jax.random.normal(kw2, (Cout, Cout, 3, 3), jnp.float32) * 0.1
    b2 = jax.random.normal(kb2, (Cout,), jnp.float32) * 0.1
    g1 = jnp.ones((Cout,), jnp.float32)
    be1 = jnp.zeros((Cout,), jnp.float32)
    g2 = jnp.ones((Cout,), jnp.float32)
    be2 = jnp.zeros((Cout,), jnp.float32)

    out = jax.block_until_ready(double_conv(x, w1, b1, g1, be1, w2, b2, g2, be2))
    ref = jax.block_until_ready(ref_double_conv(x, w1, b1, g1, be1, w2, b2, g2, be2))

    assert out.shape == (N, Cout, H, W), out.shape
    # bf16 input / conv1 weights / output vs. a pure-f32 reference: tolerance sized for
    # bf16 rounding (the conv1 activation and the entire conv2 path are kept in f32).
    np.testing.assert_allclose(np.asarray(out), np.asarray(ref), atol=1e-1, rtol=5e-2)

    print("KERNEL_OK")
</pallas_src>

<mosaic_0001>
module attributes {stable_mosaic.version = 11 : i64} {
  func.func @_double_conv_kernel(%arg0: memref<32x64xbf16, #tpu.memory_space<vmem>>, %arg1: memref<192x128xbf16, #tpu.memory_space<vmem>>, %arg2: memref<384x128xf32, #tpu.memory_space<vmem>>, %arg3: memref<1x8xf32, #tpu.memory_space<vmem>>, %arg4: memref<1x8xf32, #tpu.memory_space<vmem>>, %arg5: memref<1x8xf32, #tpu.memory_space<vmem>>, %arg6: memref<1x8xf32, #tpu.memory_space<vmem>>, %arg7: memref<128x8xf32, #tpu.memory_space<vmem>>, %arg8: memref<8x128xf32, #tpu.memory_space<vmem>>, %arg9: memref<32x128xbf16, #tpu.memory_space<vmem>>, %arg10: memref<36x64xbf16, #tpu.memory_space<vmem>>, %arg11: memref<36x128xf32, #tpu.memory_space<vmem>>) attributes {dimension_semantics = [], scalar_prefetch = 0 : i64, scratch_operands = 2 : i64, tpu.core_type = #tpu.core_type<tc>} {
    %cst = arith.constant 0.000000e+00 : bf16
    %0 = vector.broadcast %cst : bf16 to vector<1x64xbf16>
    %c0 = arith.constant 0 : index
    %c0_0 = arith.constant 0 : index
    %1 = vector.load %arg10[%c0, %c0_0] : memref<36x64xbf16, #tpu.memory_space<vmem>>, vector<1x64xbf16>
    tpu.vector_store %arg10[%c0, %c0_0], %0 {strides = array<i32>} : memref<36x64xbf16, #tpu.memory_space<vmem>>, vector<1x64xbf16>,
    %cst_1 = arith.constant 0.000000e+00 : bf16
    %2 = vector.broadcast %cst_1 : bf16 to vector<1x64xbf16>
    %c17 = arith.constant 17 : index
    %c0_2 = arith.constant 0 : index
    %3 = vector.load %arg10[%c17, %c0_2] : memref<36x64xbf16, #tpu.memory_space<vmem>>, vector<1x64xbf16>
    tpu.vector_store %arg10[%c17, %c0_2], %2 {strides = array<i32>} : memref<36x64xbf16, #tpu.memory_space<vmem>>, vector<1x64xbf16>,
    %c0_3 = arith.constant 0 : index
    %c0_4 = arith.constant 0 : index
    %4 = vector.load %arg0[%c0_3, %c0_4] : memref<32x64xbf16, #tpu.memory_space<vmem>>, vector<16x64xbf16>
    %c1 = arith.constant 1 : index
    %c0_5 = arith.constant 0 : index
    %5 = vector.load %arg10[%c1, %c0_5] : memref<36x64xbf16, #tpu.memory_space<vmem>>, vector<16x64xbf16>
    tpu.vector_store %arg10[%c1, %c0_5], %4 {strides = array<i32>} : memref<36x64xbf16, #tpu.memory_space<vmem>>, vector<16x64xbf16>,
    %cst_6 = arith.constant 0.000000e+00 : f32
    %6 = vector.broadcast %cst_6 : f32 to vector<1x128xf32>
    %c0_7 = arith.constant 0 : index
    %c0_8 = arith.constant 0 : index
    %7 = vector.load %arg11[%c0_7, %c0_8] : memref<36x128xf32, #tpu.memory_space<vmem>>, vector<1x128xf32>
    tpu.vector_store %arg11[%c0_7, %c0_8], %6 {strides = array<i32>} : memref<36x128xf32, #tpu.memory_space<vmem>>, vector<1x128xf32>,
    %cst_9 = arith.constant 0.000000e+00 : f32
    %8 = vector.broadcast %cst_9 : f32 to vector<1x128xf32>
    %c17_10 = arith.constant 17 : index
    %c0_11 = arith.constant 0 : index
    %9 = vector.load %arg11[%c17_10, %c0_11] : memref<36x128xf32, #tpu.memory_space<vmem>>, vector<1x128xf32>
    tpu.vector_store %arg11[%c17_10, %c0_11], %8 {strides = array<i32>} : memref<36x128xf32, #tpu.memory_space<vmem>>, vector<1x128xf32>,
    %cst_12 = arith.constant 0.000000e+00 : bf16
    %10 = vector.broadcast %cst_12 : bf16 to vector<1x64xbf16>
    %c18 = arith.constant 18 : index
    %c0_13 = arith.constant 0 : index
    %11 = vector.load %arg10[%c18, %c0_13] : memref<36x64xbf16, #tpu.memory_space<vmem>>, vector<1x64xbf16>
    tpu.vector_store %arg10[%c18, %c0_13], %10 {strides = array<i32>} : memref<36x64xbf16, #tpu.memory_space<vmem>>, vector<1x64xbf16>,
    %cst_14 = arith.constant 0.000000e+00 : bf16
    %12 = vector.broadcast %cst_14 : bf16 to vector<1x64xbf16>
    %c35 = arith.constant 35 : index
    %c0_15 = arith.constant 0 : index
    %13 = vector.load %arg10[%c35, %c0_15] : memref<36x64xbf16, #tpu.memory_space<vmem>>, vector<1x64xbf16>
    tpu.vector_store %arg10[%c35, %c0_15], %12 {strides = array<i32>} : memref<36x64xbf16, #tpu.memory_space<vmem>>, vector<1x64xbf16>,
    %c16 = arith.constant 16 : index
    %c0_16 = arith.constant 0 : index
    %14 = vector.load %arg0[%c16, %c0_16] : memref<32x64xbf16, #tpu.memory_space<vmem>>, vector<16x64xbf16>
    %c19 = arith.constant 19 : index
    %c0_17 = arith.constant 0 : index
    %15 = vector.load %arg10[%c19, %c0_17] : memref<36x64xbf16, #tpu.memory_space<vmem>>, vector<16x64xbf16>
    tpu.vector_store %arg10[%c19, %c0_17], %14 {strides = array<i32>} : memref<36x64xbf16, #tpu.memory_space<vmem>>, vector<16x64xbf16>,
    %cst_18 = arith.constant 0.000000e+00 : f32
    %16 = vector.broadcast %cst_18 : f32 to vector<1x128xf32>
    %c18_19 = arith.constant 18 : index
    %c0_20 = arith.constant 0 : index
    %17 = vector.load %arg11[%c18_19, %c0_20] : memref<36x128xf32, #tpu.memory_space<vmem>>, vector<1x128xf32>
    tpu.vector_store %arg11[%c18_19, %c0_20], %16 {strides = array<i32>} : memref<36x128xf32, #tpu.memory_space<vmem>>, vector<1x128xf32>,
    %cst_21 = arith.constant 0.000000e+00 : f32
    %18 = vector.broadcast %cst_21 : f32 to vector<1x128xf32>
    %c35_22 = arith.constant 35 : index
    %c0_23 = arith.constant 0 : index
    %19 = vector.load %arg11[%c35_22, %c0_23] : memref<36x128xf32, #tpu.memory_space<vmem>>, vector<1x128xf32>
    tpu.vector_store %arg11[%c35_22, %c0_23], %18 {strides = array<i32>} : memref<36x128xf32, #tpu.memory_space<vmem>>, vector<1x128xf32>,
    %cst_24 = arith.constant 0.000000e+00 : f32
    %20 = vector.broadcast %cst_24 : f32 to vector<16x128xf32>
    %c0_25 = arith.constant 0 : index
    %c0_26 = arith.constant 0 : index
    %21 = vector.load %arg10[%c0_25, %c0_26] : memref<36x64xbf16, #tpu.memory_space<vmem>>, vector<16x64xbf16>
    %c0_27 = arith.constant 0 : index
    %c0_28 = arith.constant 0 : index
    %22 = vector.load %arg1[%c0_27, %c0_28] : memref<192x128xbf16, #tpu.memory_space<vmem>>, vector<64x128xbf16>
    %cst_29 = arith.constant dense<0.000000e+00> : vector<16x128xf32>
    %23 = tpu.matmul %21, %22, %cst_29 {dimension_numbers = #tpu.dot_dimension_numbers<[1], [0], [0], [1], [0, 0, 1, 1], [], []>} : vector<16x64xbf16>, vector<64x128xbf16>, vector<16x128xf32> -> vector<16x128xf32>
    %24 = arith.addf %20, %23 : vector<16x128xf32>
    %c1_30 = arith.constant 1 : index
    %c0_31 = arith.constant 0 : index
    %25 = vector.load %arg10[%c1_30, %c0_31] : memref<36x64xbf16, #tpu.memory_space<vmem>>, vector<16x64xbf16>
    %c64 = arith.constant 64 : index
    %c0_32 = arith.constant 0 : index
    %26 = vector.load %arg1[%c64, %c0_32] : memref<192x128xbf16, #tpu.memory_space<vmem>>, vector<64x128xbf16>
    %cst_33 = arith.constant dense<0.000000e+00> : vector<16x128xf32>
    %27 = tpu.matmul %25, %26, %cst_33 {dimension_numbers = #tpu.dot_dimension_numbers<[1], [0], [0], [1], [0, 0, 1, 1], [], []>} : vector<16x64xbf16>, vector<64x128xbf16>, vector<16x128xf32> -> vector<16x128xf32>
    %28 = arith.addf %24, %27 : vector<16x128xf32>
    %c2 = arith.constant 2 : index
    %c0_34 = arith.constant 0 : index
    %29 = vector.load %arg10[%c2, %c0_34] : memref<36x64xbf16, #tpu.memory_space<vmem>>, vector<16x64xbf16>
    %c128 = arith.constant 128 : index
    %c0_35 = arith.constant 0 : index
    %30 = vector.load %arg1[%c128, %c0_35] : memref<192x128xbf16, #tpu.memory_space<vmem>>, vector<64x128xbf16>
    %cst_36 = arith.constant dense<0.000000e+00> : vector<16x128xf32>
    %31 = tpu.matmul %29, %30, %cst_36 {dimension_numbers = #tpu.dot_dimension_numbers<[1], [0], [0], [1], [0, 0, 1, 1], [], []>} : vector<16x64xbf16>, vector<64x128xbf16>, vector<16x128xf32> -> vector<16x128xf32>
    %32 = arith.addf %28, %31 : vector<16x128xf32>
    %cst_37 = arith.constant 0.000000e+00 : f32
    %33 = vector.broadcast %cst_37 : f32 to vector<16x128xf32>
    %c18_38 = arith.constant 18 : index
    %c0_39 = arith.constant 0 : index
    %34 = vector.load %arg10[%c18_38, %c0_39] : memref<36x64xbf16, #tpu.memory_space<vmem>>, vector<16x64xbf16>
    %c0_40 = arith.constant 0 : index
    %c0_41 = arith.constant 0 : index
    %35 = vector.load %arg1[%c0_40, %c0_41] : memref<192x128xbf16, #tpu.memory_space<vmem>>, vector<64x128xbf16>
    %cst_42 = arith.constant dense<0.000000e+00> : vector<16x128xf32>
    %36 = tpu.matmul %34, %35, %cst_42 {dimension_numbers = #tpu.dot_dimension_numbers<[1], [0], [0], [1], [0, 0, 1, 1], [], []>} : vector<16x64xbf16>, vector<64x128xbf16>, vector<16x128xf32> -> vector<16x128xf32>
    %37 = arith.addf %33, %36 : vector<16x128xf32>
    %c19_43 = arith.constant 19 : index
    %c0_44 = arith.constant 0 : index
    %38 = vector.load %arg10[%c19_43, %c0_44] : memref<36x64xbf16, #tpu.memory_space<vmem>>, vector<16x64xbf16>
    %c64_45 = arith.constant 64 : index
    %c0_46 = arith.constant 0 : index
    %39 = vector.load %arg1[%c64_45, %c0_46] : memref<192x128xbf16, #tpu.memory_space<vmem>>, vector<64x128xbf16>
    %cst_47 = arith.constant dense<0.000000e+00> : vector<16x128xf32>
    %40 = tpu.matmul %38, %39, %cst_47 {dimension_numbers = #tpu.dot_dimension_numbers<[1], [0], [0], [1], [0, 0, 1, 1], [], []>} : vector<16x64xbf16>, vector<64x128xbf16>, vector<16x128xf32> -> vector<16x128xf32>
    %41 = arith.addf %37, %40 : vector<16x128xf32>
    %c20 = arith.constant 20 : index
    %c0_48 = arith.constant 0 : index
    %42 = vector.load %arg10[%c20, %c0_48] : memref<36x64xbf16, #tpu.memory_space<vmem>>, vector<16x64xbf16>
    %c128_49 = arith.constant 128 : index
    %c0_50 = arith.constant 0 : index
    %43 = vector.load %arg1[%c128_49, %c0_50] : memref<192x128xbf16, #tpu.memory_space<vmem>>, vector<64x128xbf16>
    %cst_51 = arith.constant dense<0.000000e+00> : vector<16x128xf32>
    %44 = tpu.matmul %42, %43, %cst_51 {dimension_numbers = #tpu.dot_dimension_numbers<[1], [0], [0], [1], [0, 0, 1, 1], [], []>} : vector<16x64xbf16>, vector<64x128xbf16>, vector<16x128xf32> -> vector<16x128xf32>
    %45 = arith.addf %41, %44 : vector<16x128xf32>
    %cst_52 = arith.constant 0.000000e+00 : f32
    %46 = vector.broadcast %cst_52 : f32 to vector<1x128xf32>
    %cst_53 = arith.constant 0.000000e+00 : f32
    %47 = vector.broadcast %cst_53 : f32 to vector<1x128xf32>
    %cst_54 = arith.constant dense<0.000000e+00> : vector<128xf32>
    %48 = vector.multi_reduction <add>, %32, %cst_54 [0] : vector<16x128xf32> to vector<128xf32>
    %49 = vector.shape_cast %48 : vector<128xf32> to vector<1x128xf32>
    %50 = arith.addf %46, %49 : vector<1x128xf32>
    %51 = arith.mulf %32, %32 : vector<16x128xf32>
    %cst_55 = arith.constant dense<0.000000e+00> : vector<128xf32>
    %52 = vector.multi_reduction <add>, %51, %cst_55 [0] : vector<16x128xf32> to vector<128xf32>
    %53 = vector.shape_cast %52 : vector<128xf32> to vector<1x128xf32>
    %54 = arith.addf %47, %53 : vector<1x128xf32>
    %cst_56 = arith.constant dense<0.000000e+00> : vector<128xf32>
    %55 = vector.multi_reduction <add>, %45, %cst_56 [0] : vector<16x128xf32> to vector<128xf32>
    %56 = vector.shape_cast %55 : vector<128xf32> to vector<1x128xf32>
    %57 = arith.addf %50, %56 : vector<1x128xf32>
    %58 = arith.mulf %45, %45 : vector<16x128xf32>
    %cst_57 = arith.constant dense<0.000000e+00> : vector<128xf32>
    %59 = vector.multi_reduction <add>, %58, %cst_57 [0] : vector<16x128xf32> to vector<128xf32>
    %60 = vector.shape_cast %59 : vector<128xf32> to vector<1x128xf32>
    %61 = arith.addf %54, %60 : vector<1x128xf32>
    %c0_58 = arith.constant 0 : index
    %c0_59 = arith.constant 0 : index
    %62 = vector.load %arg7[%c0_58, %c0_59] : memref<128x8xf32, #tpu.memory_space<vmem>>, vector<128x8xf32>
    %cst_60 = arith.constant dense<0.000000e+00> : vector<1x8xf32>
    %63 = tpu.matmul %57, %62, %cst_60 {dimension_numbers = #tpu.dot_dimension_numbers<[1], [0], [0], [1], [0, 0, 1, 1], [], []>} : vector<1x128xf32>, vector<128x8xf32>, vector<1x8xf32> -> vector<1x8xf32>
    %c0_61 = arith.constant 0 : index
    %c0_62 = arith.constant 0 : index
    %64 = vector.load %arg7[%c0_61, %c0_62] : memref<128x8xf32, #tpu.memory_space<vmem>>, vector<128x8xf32>
    %cst_63 = arith.constant dense<0.000000e+00> : vector<1x8xf32>
    %65 = tpu.matmul %61, %64, %cst_63 {dimension_numbers = #tpu.dot_dimension_numbers<[1], [0], [0], [1], [0, 0, 1, 1], [], []>} : vector<1x128xf32>, vector<128x8xf32>, vector<1x8xf32> -> vector<1x8xf32>
    %cst_64 = arith.constant 0.001953125 : f32
    %66 = vector.broadcast %cst_64 : f32 to vector<1x8xf32>
    %67 = arith.mulf %63, %66 : vector<1x8xf32>
    %cst_65 = arith.constant 0.001953125 : f32
    %68 = vector.broadcast %cst_65 : f32 to vector<1x8xf32>
    %69 = arith.mulf %65, %68 : vector<1x8xf32>
    %70 = arith.mulf %67, %67 : vector<1x8xf32>
    %71 = arith.subf %69, %70 : vector<1x8xf32>
    %cst_66 = arith.constant 9.99999974E-6 : f32
    %72 = vector.broadcast %cst_66 : f32 to vector<1x8xf32>
    %73 = arith.addf %71, %72 : vector<1x8xf32>
    %74 = math.rsqrt %73 : vector<1x8xf32>
    %c0_67 = arith.constant 0 : index
    %c0_68 = arith.constant 0 : index
    %75 = vector.load %arg3[%c0_67, %c0_68] : memref<1x8xf32, #tpu.memory_space<vmem>>, vector<1x8xf32>
    %76 = arith.mulf %75, %74 : vector<1x8xf32>
    %c0_69 = arith.constant 0 : index
    %c0_70 = arith.constant 0 : index
    %77 = vector.load %arg4[%c0_69, %c0_70] : memref<1x8xf32, #tpu.memory_space<vmem>>, vector<1x8xf32>
    %78 = arith.mulf %67, %76 : vector<1x8xf32>
    %79 = arith.subf %77, %78 : vector<1x8xf32>
    %c0_71 = arith.constant 0 : index
    %c0_72 = arith.constant 0 : index
    %80 = vector.load %arg8[%c0_71, %c0_72] : memref<8x128xf32, #tpu.memory_space<vmem>>, vector<8x128xf32>
    %cst_73 = arith.constant dense<0.000000e+00> : vector<1x128xf32>
    %81 = tpu.matmul %76, %80, %cst_73 {dimension_numbers = #tpu.dot_dimension_numbers<[1], [0], [0], [1], [0, 0, 1, 1], [], []>} : vector<1x8xf32>, vector<8x128xf32>, vector<1x128xf32> -> vector<1x128xf32>
    %c0_74 = arith.constant 0 : index
    %c0_75 = arith.constant 0 : index
    %82 = vector.load %arg8[%c0_74, %c0_75] : memref<8x128xf32, #tpu.memory_space<vmem>>, vector<8x128xf32>
    %cst_76 = arith.constant dense<0.000000e+00> : vector<1x128xf32>
    %83 = tpu.matmul %79, %82, %cst_76 {dimension_numbers = #tpu.dot_dimension_numbers<[1], [0], [0], [1], [0, 0, 1, 1], [], []>} : vector<1x8xf32>, vector<8x128xf32>, vector<1x128xf32> -> vector<1x128xf32>
    %84 = vector.broadcast %81 : vector<1x128xf32> to vector<16x128xf32>
    %85 = arith.mulf %32, %84 : vector<16x128xf32>
    %86 = vector.broadcast %83 : vector<1x128xf32> to vector<16x128xf32>
    %87 = arith.addf %85, %86 : vector<16x128xf32>
    %cst_77 = arith.constant 0.000000e+00 : f32
    %88 = vector.broadcast %cst_77 : f32 to vector<16x128xf32>
    %89 = arith.maximumf %87, %88 : vector<16x128xf32>
    %90 = vector.broadcast %81 : vector<1x128xf32> to vector<16x128xf32>
    %91 = arith.mulf %45, %90 : vector<16x128xf32>
    %92 = vector.broadcast %83 : vector<1x128xf32> to vector<16x128xf32>
    %93 = arith.addf %91, %92 : vector<16x128xf32>
    %cst_78 = arith.constant 0.000000e+00 : f32
    %94 = vector.broadcast %cst_78 : f32 to vector<16x128xf32>
    %95 = arith.maximumf %93, %94 : vector<16x128xf32>
    %c1_79 = arith.constant 1 : index
    %c0_80 = arith.constant 0 : index
    %96 = vector.load %arg11[%c1_79, %c0_80] : memref<36x128xf32, #tpu.memory_space<vmem>>, vector<16x128xf32>
    tpu.vector_store %arg11[%c1_79, %c0_80], %89 {strides = array<i32>} : memref<36x128xf32, #tpu.memory_space<vmem>>, vector<16x128xf32>,
    %c19_81 = arith.constant 19 : index
    %c0_82 = arith.constant 0 : index
    %97 = vector.load %arg11[%c19_81, %c0_82] : memref<36x128xf32, #tpu.memory_space<vmem>>, vector<16x128xf32>
    tpu.vector_store %arg11[%c19_81, %c0_82], %95 {strides = array<i32>} : memref<36x128xf32, #tpu.memory_space<vmem>>, vector<16x128xf32>,
    %cst_83 = arith.constant 0.000000e+00 : f32
    %98 = vector.broadcast %cst_83 : f32 to vector<16x128xf32>
    %c0_84 = arith.constant 0 : index
    %c0_85 = arith.constant 0 : index
    %99 = vector.load %arg11[%c0_84, %c0_85] : memref<36x128xf32, #tpu.memory_space<vmem>>, vector<16x128xf32>
    %c0_86 = arith.constant 0 : index
    %c0_87 = arith.constant 0 : index
    %100 = vector.load %arg2[%c0_86, %c0_87] : memref<384x128xf32, #tpu.memory_space<vmem>>, vector<128x128xf32>
    %cst_88 = arith.constant dense<0.000000e+00> : vector<16x128xf32>
    %101 = tpu.matmul %99, %100, %cst_88 {dimension_numbers = #tpu.dot_dimension_numbers<[1], [0], [0], [1], [0, 0, 1, 1], [], []>} : vector<16x128xf32>, vector<128x128xf32>, vector<16x128xf32> -> vector<16x128xf32>
    %102 = arith.addf %98, %101 : vector<16x128xf32>
    %c1_89 = arith.constant 1 : index
    %c0_90 = arith.constant 0 : index
    %103 = vector.load %arg11[%c1_89, %c0_90] : memref<36x128xf32, #tpu.memory_space<vmem>>, vector<16x128xf32>
    %c128_91 = arith.constant 128 : index
    %c0_92 = arith.constant 0 : index
    %104 = vector.load %arg2[%c128_91, %c0_92] : memref<384x128xf32, #tpu.memory_space<vmem>>, vector<128x128xf32>
    %cst_93 = arith.constant dense<0.000000e+00> : vector<16x128xf32>
    %105 = tpu.matmul %103, %104, %cst_93 {dimension_numbers = #tpu.dot_dimension_numbers<[1], [0], [0], [1], [0, 0, 1, 1], [], []>} : vector<16x128xf32>, vector<128x128xf32>, vector<16x128xf32> -> vector<16x128xf32>
    %106 = arith.addf %102, %105 : vector<16x128xf32>
    %c2_94 = arith.constant 2 : index
    %c0_95 = arith.constant 0 : index
    %107 = vector.load %arg11[%c2_94, %c0_95] : memref<36x128xf32, #tpu.memory_space<vmem>>, vector<16x128xf32>
    %c256 = arith.constant 256 : index
    %c0_96 = arith.constant 0 : index
    %108 = vector.load %arg2[%c256, %c0_96] : memref<384x128xf32, #tpu.memory_space<vmem>>, vector<128x128xf32>
    %cst_97 = arith.constant dense<0.000000e+00> : vector<16x128xf32>
    %109 = tpu.matmul %107, %108, %cst_97 {dimension_numbers = #tpu.dot_dimension_numbers<[1], [0], [0], [1], [0, 0, 1, 1], [], []>} : vector<16x128xf32>, vector<128x128xf32>, vector<16x128xf32> -> vector<16x128xf32>
    %110 = arith.addf %106, %109 : vector<16x128xf32>
    %cst_98 = arith.constant 0.000000e+00 : f32
    %111 = vector.broadcast %cst_98 : f32 to vector<16x128xf32>
    %c18_99 = arith.constant 18 : index
    %c0_100 = arith.constant 0 : index
    %112 = vector.load %arg11[%c18_99, %c0_100] : memref<36x128xf32, #tpu.memory_space<vmem>>, vector<16x128xf32>
    %c0_101 = arith.constant 0 : index
    %c0_102 = arith.constant 0 : index
    %113 = vector.load %arg2[%c0_101, %c0_102] : memref<384x128xf32, #tpu.memory_space<vmem>>, vector<128x128xf32>
    %cst_103 = arith.constant dense<0.000000e+00> : vector<16x128xf32>
    %114 = tpu.matmul %112, %113, %cst_103 {dimension_numbers = #tpu.dot_dimension_numbers<[1], [0], [0], [1], [0, 0, 1, 1], [], []>} : vector<16x128xf32>, vector<128x128xf32>, vector<16x128xf32> -> vector<16x128xf32>
    %115 = arith.addf %111, %114 : vector<16x128xf32>
    %c19_104 = arith.constant 19 : index
    %c0_105 = arith.constant 0 : index
    %116 = vector.load %arg11[%c19_104, %c0_105] : memref<36x128xf32, #tpu.memory_space<vmem>>, vector<16x128xf32>
    %c128_106 = arith.constant 128 : index
    %c0_107 = arith.constant 0 : index
    %117 = vector.load %arg2[%c128_106, %c0_107] : memref<384x128xf32, #tpu.memory_space<vmem>>, vector<128x128xf32>
    %cst_108 = arith.constant dense<0.000000e+00> : vector<16x128xf32>
    %118 = tpu.matmul %116, %117, %cst_108 {dimension_numbers = #tpu.dot_dimension_numbers<[1], [0], [0], [1], [0, 0, 1, 1], [], []>} : vector<16x128xf32>, vector<128x128xf32>, vector<16x128xf32> -> vector<16x128xf32>
    %119 = arith.addf %115, %118 : vector<16x128xf32>
    %c20_109 = arith.constant 20 : index
    %c0_110 = arith.constant 0 : index
    %120 = vector.load %arg11[%c20_109, %c0_110] : memref<36x128xf32, #tpu.memory_space<vmem>>, vector<16x128xf32>
    %c256_111 = arith.constant 256 : index
    %c0_112 = arith.constant 0 : index
    %121 = vector.load %arg2[%c256_111, %c0_112] : memref<384x128xf32, #tpu.memory_space<vmem>>, vector<128x128xf32>
    %cst_113 = arith.constant dense<0.000000e+00> : vector<16x128xf32>
    %122 = tpu.matmul %120, %121, %cst_113 {dimension_numbers = #tpu.dot_dimension_numbers<[1], [0], [0], [1], [0, 0, 1, 1], [], []>} : vector<16x128xf32>, vector<128x128xf32>, vector<16x128xf32> -> vector<16x128xf32>
    %123 = arith.addf %119, %122 : vector<16x128xf32>
    %cst_114 = arith.constant 0.000000e+00 : f32
    %124 = vector.broadcast %cst_114 : f32 to vector<1x128xf32>
    %cst_115 = arith.constant 0.000000e+00 : f32
    %125 = vector.broadcast %cst_115 : f32 to vector<1x128xf32>
    %cst_116 = arith.constant dense<0.000000e+00> : vector<128xf32>
    %126 = vector.multi_reduction <add>, %110, %cst_116 [0] : vector<16x128xf32> to vector<128xf32>
    %127 = vector.shape_cast %126 : vector<128xf32> to vector<1x128xf32>
    %128 = arith.addf %124, %127 : vector<1x128xf32>
    %129 = arith.mulf %110, %110 : vector<16x128xf32>
    %cst_117 = arith.constant dense<0.000000e+00> : vector<128xf32>
    %130 = vector.multi_reduction <add>, %129, %cst_117 [0] : vector<16x128xf32> to vector<128xf32>
    %131 = vector.shape_cast %130 : vector<128xf32> to vector<1x128xf32>
    %132 = arith.addf %125, %131 : vector<1x128xf32>
    %cst_118 = arith.constant dense<0.000000e+00> : vector<128xf32>
    %133 = vector.multi_reduction <add>, %123, %cst_118 [0] : vector<16x128xf32> to vector<128xf32>
    %134 = vector.shape_cast %133 : vector<128xf32> to vector<1x128xf32>
    %135 = arith.addf %128, %134 : vector<1x128xf32>
    %136 = arith.mulf %123, %123 : vector<16x128xf32>
    %cst_119 = arith.constant dense<0.000000e+00> : vector<128xf32>
    %137 = vector.multi_reduction <add>, %136, %cst_119 [0] : vector<16x128xf32> to vector<128xf32>
    %138 = vector.shape_cast %137 : vector<128xf32> to vector<1x128xf32>
    %139 = arith.addf %132, %138 : vector<1x128xf32>
    %c0_120 = arith.constant 0 : index
    %c0_121 = arith.constant 0 : index
    %140 = vector.load %arg7[%c0_120, %c0_121] : memref<128x8xf32, #tpu.memory_space<vmem>>, vector<128x8xf32>
    %cst_122 = arith.constant dense<0.000000e+00> : vector<1x8xf32>
    %141 = tpu.matmul %135, %140, %cst_122 {dimension_numbers = #tpu.dot_dimension_numbers<[1], [0], [0], [1], [0, 0, 1, 1], [], []>} : vector<1x128xf32>, vector<128x8xf32>, vector<1x8xf32> -> vector<1x8xf32>
    %c0_123 = arith.constant 0 : index
    %c0_124 = arith.constant 0 : index
    %142 = vector.load %arg7[%c0_123, %c0_124] : memref<128x8xf32, #tpu.memory_space<vmem>>, vector<128x8xf32>
    %cst_125 = arith.constant dense<0.000000e+00> : vector<1x8xf32>
    %143 = tpu.matmul %139, %142, %cst_125 {dimension_numbers = #tpu.dot_dimension_numbers<[1], [0], [0], [1], [0, 0, 1, 1], [], []>} : vector<1x128xf32>, vector<128x8xf32>, vector<1x8xf32> -> vector<1x8xf32>
    %cst_126 = arith.constant 0.001953125 : f32
    %144 = vector.broadcast %cst_126 : f32 to vector<1x8xf32>
    %145 = arith.mulf %141, %144 : vector<1x8xf32>
    %cst_127 = arith.constant 0.001953125 : f32
    %146 = vector.broadcast %cst_127 : f32 to vector<1x8xf32>
    %147 = arith.mulf %143, %146 : vector<1x8xf32>
    %148 = arith.mulf %145, %145 : vector<1x8xf32>
    %149 = arith.subf %147, %148 : vector<1x8xf32>
    %cst_128 = arith.constant 9.99999974E-6 : f32
    %150 = vector.broadcast %cst_128 : f32 to vector<1x8xf32>
    %151 = arith.addf %149, %150 : vector<1x8xf32>
    %152 = math.rsqrt %151 : vector<1x8xf32>
    %c0_129 = arith.constant 0 : index
    %c0_130 = arith.constant 0 : index
    %153 = vector.load %arg5[%c0_129, %c0_130] : memref<1x8xf32, #tpu.memory_space<vmem>>, vector<1x8xf32>
    %154 = arith.mulf %153, %152 : vector<1x8xf32>
    %c0_131 = arith.constant 0 : index
    %c0_132 = arith.constant 0 : index
    %155 = vector.load %arg6[%c0_131, %c0_132] : memref<1x8xf32, #tpu.memory_space<vmem>>, vector<1x8xf32>
    %156 = arith.mulf %145, %154 : vector<1x8xf32>
    %157 = arith.subf %155, %156 : vector<1x8xf32>
    %c0_133 = arith.constant 0 : index
    %c0_134 = arith.constant 0 : index
    %158 = vector.load %arg8[%c0_133, %c0_134] : memref<8x128xf32, #tpu.memory_space<vmem>>, vector<8x128xf32>
    %cst_135 = arith.constant dense<0.000000e+00> : vector<1x128xf32>
    %159 = tpu.matmul %154, %158, %cst_135 {dimension_numbers = #tpu.dot_dimension_numbers<[1], [0], [0], [1], [0, 0, 1, 1], [], []>} : vector<1x8xf32>, vector<8x128xf32>, vector<1x128xf32> -> vector<1x128xf32>
    %c0_136 = arith.constant 0 : index
    %c0_137 = arith.constant 0 : index
    %160 = vector.load %arg8[%c0_136, %c0_137] : memref<8x128xf32, #tpu.memory_space<vmem>>, vector<8x128xf32>
    %cst_138 = arith.constant dense<0.000000e+00> : vector<1x128xf32>
    %161 = tpu.matmul %157, %160, %cst_138 {dimension_numbers = #tpu.dot_dimension_numbers<[1], [0], [0], [1], [0, 0, 1, 1], [], []>} : vector<1x8xf32>, vector<8x128xf32>, vector<1x128xf32> -> vector<1x128xf32>
    %162 = vector.broadcast %159 : vector<1x128xf32> to vector<16x128xf32>
    %163 = arith.mulf %110, %162 : vector<16x128xf32>
    %164 = vector.broadcast %161 : vector<1x128xf32> to vector<16x128xf32>
    %165 = arith.addf %163, %164 : vector<16x128xf32>
    %cst_139 = arith.constant 0.000000e+00 : f32
    %166 = vector.broadcast %cst_139 : f32 to vector<16x128xf32>
    %167 = arith.maximumf %165, %166 : vector<16x128xf32>
    %168 = vector.broadcast %159 : vector<1x128xf32> to vector<16x128xf32>
    %169 = arith.mulf %123, %168 : vector<16x128xf32>
    %170 = vector.broadcast %161 : vector<1x128xf32> to vector<16x128xf32>
    %171 = arith.addf %169, %170 : vector<16x128xf32>
    %cst_140 = arith.constant 0.000000e+00 : f32
    %172 = vector.broadcast %cst_140 : f32 to vector<16x128xf32>
    %173 = arith.maximumf %171, %172 : vector<16x128xf32>
    %174 = arith.truncf %167 : vector<16x128xf32> to vector<16x128xbf16>
    %c0_141 = arith.constant 0 : index
    %c0_142 = arith.constant 0 : index
    %175 = vector.load %arg9[%c0_141, %c0_142] : memref<32x128xbf16, #tpu.memory_space<vmem>>, vector<16x128xbf16>
    tpu.vector_store %arg9[%c0_141, %c0_142], %174 {strides = array<i32>} : memref<32x128xbf16, #tpu.memory_space<vmem>>, vector<16x128xbf16>,
    %176 = arith.truncf %173 : vector<16x128xf32> to vector<16x128xbf16>
    %c16_143 = arith.constant 16 : index
    %c0_144 = arith.constant 0 : index
    %177 = vector.load %arg9[%c16_143, %c0_144] : memref<32x128xbf16, #tpu.memory_space<vmem>>, vector<16x128xbf16>
    tpu.vector_store %arg9[%c16_143, %c0_144], %176 {strides = array<i32>} : memref<32x128xbf16, #tpu.memory_space<vmem>>, vector<16x128xbf16>,
    return
  }
}

</mosaic_0001>

<llo_original>
// kernel: tpu_custom_call.1
$region0: #{tpu_custom_call.1}
  #allocation0 [shape = 'u32[]', space=smem, size = 0x4, offset = 0x4, fixed_abs, tag = 'smem constant byte address 0x4 - core index']
  #allocation1 [shape = 'u32[144,128]{1,0:T(1,128)}', space=vmem, size = 0x12000, scoped, tag = 'internal scratch']
  #allocation2 [shape = 'bf16[36,64]{1,0:T(8,128)(2,1)}', space=vmem, size = 0x2800, scoped, tag = 'scratch operand']
  #allocation3 [shape = 'f32[36,128]{1,0:T(8,128)}', space=vmem, size = 0x5000, scoped, tag = 'scratch operand']
  %s0 = inlined_call_operand.vmem [shape: bf16[32,64], index: 0, kind: input, shape index: {}]
  %s1 = inlined_call_operand.vmem [shape: bf16[192,128], index: 1, kind: input, shape index: {}]
  %s2 = inlined_call_operand.hbm [shape: f32[384,128], index: 2, kind: input, shape index: {}]
  %s3 = inlined_call_operand.vmem [shape: f32[1,8], index: 3, kind: input, shape index: {}]
  %s4 = inlined_call_operand.vmem [shape: f32[1,8], index: 4, kind: input, shape index: {}]
  %s5 = inlined_call_operand.vmem [shape: f32[1,8], index: 5, kind: input, shape index: {}]
  %s6 = inlined_call_operand.vmem [shape: f32[1,8], index: 6, kind: input, shape index: {}]
  %s7 = inlined_call_operand.vmem [shape: f32[128,8], index: 7, kind: input, shape index: {}]
  %s8 = inlined_call_operand.vmem [shape: f32[8,128], index: 8, kind: input, shape index: {}]
  %s9 = inlined_call_operand.hbm [shape: bf16[32,128], index: 9, kind: output, shape index: {}]
  %s10 = sld [smem:[#allocation0]]
  $region50: #{tpu_custom_call.1} parent=0
    _
  %s12 = ssub.s32 1, %s10
  %s13 = scalar_select 0, %s12, %s10
  $region1: #{tpu_custom_call.1} parent=0
    #allocation4 [shape = 'u8[196608]{0}', space=vmem, size = 0x30000, scoped, tag = 'input window, operand 2, single buffered']
    #allocation5 [shape = 's32[1]{0}', space=sflag, size = 0x4, scoped, tag = 'scoped memory for tpu_custom_call.1']
    #allocation6 [shape = 's32[1]{0}', space=sflag, size = 0x4, scoped, tag = 'scoped memory for tpu_custom_call.1']
    #allocation7 [shape = 'u8[8192]{0}', space=vmem, size = 0x2000, scoped, tag = 'output window, operand 0, single buffered']
    %14 = vsyncpa [#allocation5], 0
    %15 = vsyncpa [#allocation6], 0
    // Predicated region
    $region2: #{tpu_custom_call.1} parent=1 // pred_check
      _
    $region3: #{tpu_custom_call.1} parent=1 // pred_check_branch
      %17 = sbr.rel (0) target = $region5
    $region4: #{tpu_custom_call.1} parent=1 // pred_region
      _
    $region5: #{tpu_custom_call.1} parent=1 // pred_fallthru
      _
    // Predicated region
    $region6: #{tpu_custom_call.1} parent=1 // pred_check
      _
    $region7: #{tpu_custom_call.1} parent=1 // pred_check_branch
      %19 = sbr.rel (0) target = $region9
    $region8: #{tpu_custom_call.1} parent=1 // pred_region
      _
    $region9: #{tpu_custom_call.1} parent=1 // pred_fallthru
      _
    // Predicated region
    $region10: #{tpu_custom_call.1} parent=1 // pred_check
      _
    $region11: #{tpu_custom_call.1} parent=1 // pred_check_branch
      %21 = sbr.rel (0) target = $region13
    $region12: #{tpu_custom_call.1} parent=1 // pred_region
      %s23 = ssub.s32 6144, 6144
      %24 = vsyncadd [#allocation5], %s23
      %s25 = sshll.u32 [#allocation4], 4
      %s26 = int_to_ptr.vmem [resolvable:$true] %s25
      %31 = dma.hbm_to_vmem [thread:$0]  %s2, 6144, %s26, [#allocation5], 128, 128, 8
    $region13: #{tpu_custom_call.1} parent=1 // pred_fallthru
      _
    // Predicated region
    $region14: #{tpu_custom_call.1} parent=1 // pred_check
      _
    $region15: #{tpu_custom_call.1} parent=1 // pred_check_branch
      %33 = sbr.rel (0) target = $region17
    $region16: #{tpu_custom_call.1} parent=1 // pred_region
      _
    $region17: #{tpu_custom_call.1} parent=1 // pred_fallthru
      _
    // Predicated region
    $region18: #{tpu_custom_call.1} parent=1 // pred_check
      _
    $region19: #{tpu_custom_call.1} parent=1 // pred_check_branch
      %35 = sbr.rel (0) target = $region21
    $region20: #{tpu_custom_call.1} parent=1 // pred_region
      _
    $region21: #{tpu_custom_call.1} parent=1 // pred_fallthru
      _
    // Predicated region
    $region22: #{tpu_custom_call.1} parent=1 // pred_check
      _
    $region23: #{tpu_custom_call.1} parent=1 // pred_check_branch
      %37 = sbr.rel (0) target = $region25
    $region24: #{tpu_custom_call.1} parent=1 // pred_region
      _
    $region25: #{tpu_custom_call.1} parent=1 // pred_fallthru
      _
    // Predicated region
    $region26: #{tpu_custom_call.1} parent=1 // pred_check
      _
    $region27: #{tpu_custom_call.1} parent=1 // pred_check_branch
      %39 = sbr.rel (0) target = $region29
    $region28: #{tpu_custom_call.1} parent=1 // pred_region
      _
    $region29: #{tpu_custom_call.1} parent=1 // pred_fallthru
      _
    // Predicated region
    $region30: #{tpu_custom_call.1} parent=1 // pred_check
      _
    $region31: #{tpu_custom_call.1} parent=1 // pred_check_branch
      %41 = sbr.rel (0) target = $region33
    $region32: #{tpu_custom_call.1} parent=1 // pred_region
      _
    $region33: #{tpu_custom_call.1} parent=1 // pred_fallthru
      _
    // Predicated region
    $region34: #{tpu_custom_call.1} parent=1 // pred_check
      _
    $region35: #{tpu_custom_call.1} parent=1 // pred_check_branch
      %43 = sbr.rel (0) target = $region37
    $region36: #{tpu_custom_call.1} parent=1 // pred_region
      _
    $region37: #{tpu_custom_call.1} parent=1 // pred_fallthru
      _
    // Predicated region
    $region38: #{tpu_custom_call.1} parent=1 // pred_check
      _
    $region39: #{tpu_custom_call.1} parent=1 // pred_check_branch
      %45 = sbr.rel (0) target = $region41
    $region40: #{tpu_custom_call.1} parent=1 // pred_region
      %46 = dma.done [#allocation5], 6144
    $region41: #{tpu_custom_call.1} parent=1 // pred_fallthru
      _
    %vm48 = vcmask 516096
    %vm49 = vsmask.f32 256
    %vm50 = vmand %vm48, %vm49
    %v51 = vld [vmem:[#allocation2] sm:$0x1]
    %v52 = vsel %vm50, 0, %v51
    %53 = vst [vmem:[#allocation2] sm:$0x1] %v52
    %vm54 = vsmask.f32 7938
    %vm55 = vmand %vm48, %vm54
    %v56 = vld [vmem:[#allocation2 + $0x8] sm:$0x1]
    %v57 = vsel %vm55, 0, %v56
    %58 = vst [vmem:[#allocation2 + $0x8] sm:$0x1] %v57
    %v59 = vld [vmem:[%s0] sm:$0xf]
    %v60 = vld [vmem:[%s0 + $0x4] sm:$0xf]
    %vm61 = vsmask.f32 4368
    %vm62 = vmor %vm49, %vm61
    %v64 = vshrl.u32 %v59, 16
    %v66 = vrot.slane %v64, 7
    %v67 = vshll.u32 %v59, 16
    %v69 = vor.u32 %v66, %v67
    %v70 = vrot.slane %v66, 4
    %v72 = vshrl.u32 %v60, 16
    %v74 = vrot.slane %v72, 7
    %v75 = vshll.u32 %v60, 16
    %v77 = vor.u32 %v74, %v75
    %v78 = vsel %vm62, %v70, %v77
    %v79 = vrot.slane %v74, 4
    %vm83 = vcmask 519168
    %vm84 = vmand %vm83, %vm54
    %v85 = vld [vmem:[#allocation2] sm:$0xf]
    %v86 = vsel %vm84, %v69, %v85
    %87 = vst [vmem:[#allocation2] sm:$0xf] %v86
    %vm88 = vcmask 519168
    %89 = vst.msk [vmem:[#allocation2 + $0x4] sm:$0xf] %vm88, %v78
    %v90 = vld [vmem:[#allocation2 + $0x8] sm:$0x1]
    %v91 = vsel %vm50, %v79, %v90
    %92 = vst [vmem:[#allocation2 + $0x8] sm:$0x1] %v91
    %93 = vst [vmem:[#allocation3] sm:$0x1] 0.0
    %94 = vst [vmem:[#allocation3 + $0x11] sm:$0x1] 0.0
    %vm95 = vcmask 517121
    %vm96 = vsmask.f32 1280
    %vm97 = vmand %vm95, %vm96
    %v98 = vld [vmem:[#allocation2 + $0x8] sm:$0x2]
    %v99 = vsel %vm97, 0, %v98
    %100 = vst [vmem:[#allocation2 + $0x8] sm:$0x2] %v99
    %vm101 = vsmask.f32 7942
    %vm102 = vmand %vm95, %vm101
    %v103 = vld [vmem:[#allocation2 + $0x10] sm:$0x2]
    %v104 = vsel %vm102, 0, %v103
    %105 = vst [vmem:[#allocation2 + $0x10] sm:$0x2] %v104
    %v106 = vld [vmem:[%s0 + $0x8] sm:$0xf]
    %v107 = vld [vmem:[%s0 + $0xc] sm:$0xf]
    %vm108 = vsmask.f32 5392
    %vm109 = vmor %vm96, %vm108
    %v111 = vshrl.u32 %v106, 16
    %v113 = vrot.slane %v111, 6
    %v114 = vshll.u32 %v106, 16
    %v116 = vrot.slane %v114, 7
    %v117 = vor.u32 %v113, %v116
    %v118 = vrot.slane %v117, 4
    %v120 = vshrl.u32 %v107, 16
    %v122 = vrot.slane %v120, 6
    %v123 = vshll.u32 %v107, 16
    %v125 = vrot.slane %v123, 7
    %v126 = vor.u32 %v122, %v125
    %v127 = vsel %vm109, %v118, %v126
    %v128 = vrot.slane %v126, 4
    %vm132 = vcmask 519169
    %vm133 = vmand %vm132, %vm101
    %v134 = vld [vmem:[#allocation2 + $0x8] sm:$0xe]
    %v135 = vsel %vm133, %v117, %v134
    %136 = vst [vmem:[#allocation2 + $0x8] sm:$0xe] %v135
    %137 = vst.msk [vmem:[#allocation2 + $0xc] sm:$0xf] %vm88, %v127
    %vm138 = vcmask 517120
    %vm139 = vmand %vm138, %vm96
    %v140 = vld [vmem:[#allocation2 + $0x10] sm:$0x3]
    %v141 = vsel %vm139, %v128, %v140
    %142 = vst [vmem:[#allocation2 + $0x10] sm:$0x3] %v141
    %143 = vst [vmem:[#allocation3 + $0x12] sm:$0x1] 0.0
    %144 = vst [vmem:[#allocation3 + $0x23] sm:$0x1] 0.0
    %v145 = vld [vmem:[#allocation2] sm:$0xf]
    %v146 = vld [vmem:[#allocation2 + $0x4] sm:$0xf]
    %v147 = vld [vmem:[%s1] sm:$0xf]
    %v148 = vld [vmem:[%s1 + $0x4] sm:$0xf]
    %v149 = vld [vmem:[%s1 + $0x8] sm:$0xf]
    %v150 = vld [vmem:[%s1 + $0xc] sm:$0xf]
    %v151 = vld [vmem:[%s1 + $0x10] sm:$0xf]
    %v152 = vld [vmem:[%s1 + $0x14] sm:$0xf]
    %v153 = vld [vmem:[%s1 + $0x18] sm:$0xf]
    %v154 = vld [vmem:[%s1 + $0x1c] sm:$0xf]
    %v155 = vld [vmem:[#allocation2 + $0x8] sm:$0x1]
    %v156 = vld [vmem:[%s1 + $0x20] sm:$0xf]
    %v157 = vld [vmem:[%s1 + $0x24] sm:$0xf]
    %v158 = vld [vmem:[%s1 + $0x28] sm:$0xf]
    %v159 = vld [vmem:[%s1 + $0x2c] sm:$0xf]
    %v160 = vld [vmem:[%s1 + $0x30] sm:$0xf]
    %v161 = vld [vmem:[%s1 + $0x34] sm:$0xf]
    %v162 = vld [vmem:[%s1 + $0x38] sm:$0xf]
    %v163 = vld [vmem:[%s1 + $0x3c] sm:$0xf]
    %v167 = vunpack.c.l.b16 %v145
    %v168 = vunpack.c.l.b16 %v146
    %v169 = vunpack.c.l.b16 %v155
    %v170 = vpack.c.b16 %v168, %v167
    %v171 = vpack.c.b16 %v169, %v169
    %vm172 = vsmask.f32 7424
    %v174 = vshrl.u32 %v170, 16
    %v176 = vshll.u32 %v170, 16
    %v178 = vrot.slane %v176, 1
    %v179 = vor.u32 %v174, %v178
    %v181 = vshll.u32 %v171, 16
    %v183 = vrot.slane %v181, 1
    %v184 = vsel %vm172, %v179, %v183
    %v193 = vunpack.c.l.b16 %v156
    %v194 = vunpack.c.l.b16 %v157
    %v195 = vunpack.c.l.b16 %v158
    %v196 = vunpack.c.l.b16 %v159
    %v197 = vunpack.c.l.b16 %v160
    %v198 = vunpack.c.l.b16 %v161
    %v199 = vunpack.c.l.b16 %v162
    %v200 = vunpack.c.l.b16 %v163
    %v201 = vpack.c.b16 %v194, %v193
    %v202 = vpack.c.b16 %v196, %v195
    %v203 = vpack.c.b16 %v198, %v197
    %v204 = vpack.c.b16 %v200, %v199
    %vm209 = vcmask 523264
    %v211 = vsel %vm209, %v184, 0
    %213 = vmatprep.subr.bf16.mxu0 0
    %214 = vmatpush1.bf16.msra.mxu0 %v201
    %215 = vmatprep.subr.bf16.mxu0 0
    %216 = vmatpush1.bf16.msra.mxu0 %v202
    %217 = vmatprep.subr.bf16.mxu0 0
    %218 = vmatpush1.bf16.msra.mxu0 %v203
    %219 = vmatprep.subr.bf16.mxu0 0
    %220 = vmatpush1.bf16.msra.mxu0 %v204
    %221 = vmatprep.subr.bf16.mxu0 0
    %222 = vmatpush1.bf16.msra.mxu0 0
    %223 = vmatprep.subr.bf16.mxu0 0
    %224 = vmatpush1.bf16.msra.mxu0 0
    %225 = vmatprep.subr.bf16.mxu0 0
    %226 = vmatpush1.bf16.msra.mxu0 0
    %227 = vmatprep.subr.bf16.mxu0 0
    %228 = vmatpush1.bf16.msra.mxu0 0
    %229 = vmatprep.subr.bf16.mxu0 0
    %230 = vmatpush1.bf16.msra.mxu0 0
    %231 = vmatprep.subr.bf16.mxu0 0
    %232 = vmatpush1.bf16.msra.mxu0 0
    %233 = vmatprep.subr.bf16.mxu0 0
    %234 = vmatpush1.bf16.msra.mxu0 0
    %235 = vmatprep.subr.bf16.mxu0 0
    %236 = vmatpush1.bf16.msra.mxu0 0
    %237 = vmatprep.subr.bf16.mxu0 0
    %238 = vmatpush1.bf16.msra.mxu0 0
    %239 = vmatprep.subr.bf16.mxu0 0
    %240 = vmatpush1.bf16.msra.mxu0 0
    %241 = vmatprep.subr.bf16.mxu0 0
    %242 = vmatpush1.bf16.msra.mxu0 0
    %243 = vmatprep.subr.bf16.mxu0 0
    %244 = vmatpush1.bf16.msra.mxu0 0
    %245 = vmatprep.mubr.bf16.mxu0 0
    %246 = vmatmul.mubr.bf16.gmra.mrb[0].mxu0 %v211
    %v247 = vpop.f32.mrb[0].mxu0
    %v248 = vadd.f32 0.0, %v247
    %v249 = vpop.f32.mrb[0].mxu0
    %v250 = vpop.f32.mrb[0].mxu0
    %v251 = vadd.f32 0.0, %v250
    %v252 = vpop.f32.mrb[0].mxu0
    %253 = vdwg.mxu0
    %v262 = vunpack.c.l.b16 %v147
    %v263 = vunpack.c.l.b16 %v148
    %v264 = vunpack.c.l.b16 %v149
    %v265 = vunpack.c.l.b16 %v150
    %v266 = vunpack.c.l.b16 %v151
    %v267 = vunpack.c.l.b16 %v152
    %v268 = vunpack.c.l.b16 %v153
    %v269 = vunpack.c.l.b16 %v154
    %v270 = vpack.c.b16 %v263, %v262
    %v271 = vpack.c.b16 %v265, %v264
    %v272 = vpack.c.b16 %v267, %v266
    %v273 = vpack.c.b16 %v269, %v268
    %v278 = vsel %vm209, %v170, 0
    %280 = vmatprep.subr.bf16.mxu0 0
    %281 = vmatpush1.bf16.msra.mxu0 %v270
    %282 = vmatprep.subr.bf16.mxu0 0
    %283 = vmatpush1.bf16.msra.mxu0 %v271
    %284 = vmatprep.subr.bf16.mxu0 0
    %285 = vmatpush1.bf16.msra.mxu0 %v272
    %286 = vmatprep.subr.bf16.mxu0 0
    %287 = vmatpush1.bf16.msra.mxu0 %v273
    %288 = vmatprep.subr.bf16.mxu0 0
    %289 = vmatpush1.bf16.msra.mxu0 0
    %290 = vmatprep.subr.bf16.mxu0 0
    %291 = vmatpush1.bf16.msra.mxu0 0
    %292 = vmatprep.subr.bf16.mxu0 0
    %293 = vmatpush1.bf16.msra.mxu0 0
    %294 = vmatprep.subr.bf16.mxu0 0
    %295 = vmatpush1.bf16.msra.mxu0 0
    %296 = vmatprep.subr.bf16.mxu0 0
    %297 = vmatpush1.bf16.msra.mxu0 0
    %298 = vmatprep.subr.bf16.mxu0 0
    %299 = vmatpush1.bf16.msra.mxu0 0
    %300 = vmatprep.subr.bf16.mxu0 0
    %301 = vmatpush1.bf16.msra.mxu0 0
    %302 = vmatprep.subr.bf16.mxu0 0
    %303 = vmatpush1.bf16.msra.mxu0 0
    %304 = vmatprep.subr.bf16.mxu0 0
    %305 = vmatpush1.bf16.msra.mxu0 0
    %306 = vmatprep.subr.bf16.mxu0 0
    %307 = vmatpush1.bf16.msra.mxu0 0
    %308 = vmatprep.subr.bf16.mxu0 0
    %309 = vmatpush1.bf16.msra.mxu0 0
    %310 = vmatprep.subr.bf16.mxu0 0
    %311 = vmatpush1.bf16.msra.mxu0 0
    %312 = vmatprep.mubr.bf16.mxu0 0
    %313 = vmatmul.mubr.bf16.gmra.mrb[0].mxu0 %v278
    %v314 = vpop.f32.mrb[0].mxu0
    %v315 = vadd.f32 %v248, %v314
    %v316 = vpop.f32.mrb[0].mxu0
    %v317 = vpop.f32.mrb[0].mxu0
    %v318 = vadd.f32 %v251, %v317
    %v319 = vpop.f32.mrb[0].mxu0
    %320 = vdwg.mxu0
    %v321 = vld [vmem:[#allocation2] sm:$0xe]
    %v322 = vld [vmem:[%s1 + $0x40] sm:$0xf]
    %v323 = vld [vmem:[%s1 + $0x44] sm:$0xf]
    %v324 = vld [vmem:[%s1 + $0x48] sm:$0xf]
    %v325 = vld [vmem:[%s1 + $0x4c] sm:$0xf]
    %v326 = vld [vmem:[%s1 + $0x50] sm:$0xf]
    %v327 = vld [vmem:[%s1 + $0x54] sm:$0xf]
    %v328 = vld [vmem:[%s1 + $0x58] sm:$0xf]
    %v329 = vld [vmem:[%s1 + $0x5c] sm:$0xf]
    %v331 = vunpack.c.l.b16 %v321
    %v332 = vpack.c.b16 %v168, %v331
    %vm333 = vcmask 1046528
    %v334 = vrot.slane %v332, 1
    %v335 = vrot.slane %v171, 1
    %v336 = vsel %vm333, %v334, %v335
    %v345 = vunpack.c.l.b16 %v322
    %v346 = vunpack.c.l.b16 %v323
    %v347 = vunpack.c.l.b16 %v324
    %v348 = vunpack.c.l.b16 %v325
    %v349 = vunpack.c.l.b16 %v326
    %v350 = vunpack.c.l.b16 %v327
    %v351 = vunpack.c.l.b16 %v328
    %v352 = vunpack.c.l.b16 %v329
    %v353 = vpack.c.b16 %v346, %v345
    %v354 = vpack.c.b16 %v348, %v347
    %v355 = vpack.c.b16 %v350, %v349
    %v356 = vpack.c.b16 %v352, %v351
    %v362 = vsel %vm209, %v336, 0
    %364 = vmatprep.subr.bf16.mxu0 0
    %365 = vmatpush1.bf16.msra.mxu0 %v353
    %366 = vmatprep.subr.bf16.mxu0 0
    %367 = vmatpush1.bf16.msra.mxu0 %v354
    %368 = vmatprep.subr.bf16.mxu0 0
    %369 = vmatpush1.bf16.msra.mxu0 %v355
    %370 = vmatprep.subr.bf16.mxu0 0
    %371 = vmatpush1.bf16.msra.mxu0 %v356
    %372 = vmatprep.subr.bf16.mxu0 0
    %373 = vmatpush1.bf16.msra.mxu0 0
    %374 = vmatprep.subr.bf16.mxu0 0
    %375 = vmatpush1.bf16.msra.mxu0 0
    %376 = vmatprep.subr.bf16.mxu0 0
    %377 = vmatpush1.bf16.msra.mxu0 0
    %378 = vmatprep.subr.bf16.mxu0 0
    %379 = vmatpush1.bf16.msra.mxu0 0
    %380 = vmatprep.subr.bf16.mxu0 0
    %381 = vmatpush1.bf16.msra.mxu0 0
    %382 = vmatprep.subr.bf16.mxu0 0
    %383 = vmatpush1.bf16.msra.mxu0 0
    %384 = vmatprep.subr.bf16.mxu0 0
    %385 = vmatpush1.bf16.msra.mxu0 0
    %386 = vmatprep.subr.bf16.mxu0 0
    %387 = vmatpush1.bf16.msra.mxu0 0
    %388 = vmatprep.subr.bf16.mxu0 0
    %389 = vmatpush1.bf16.msra.mxu0 0
    %390 = vmatprep.subr.bf16.mxu0 0
    %391 = vmatpush1.bf16.msra.mxu0 0
    %392 = vmatprep.subr.bf16.mxu0 0
    %393 = vmatpush1.bf16.msra.mxu0 0
    %394 = vmatprep.subr.bf16.mxu0 0
    %395 = vmatpush1.bf16.msra.mxu0 0
    %396 = vmatprep.mubr.bf16.mxu0 0
    %397 = vmatmul.mubr.bf16.gmra.mrb[0].mxu0 %v362
    %v398 = vpop.f32.mrb[0].mxu0
    %v399 = vadd.f32 0.0, %v398
    %v400 = vpop.f32.mrb[0].mxu0
    %v401 = vpop.f32.mrb[0].mxu0
    %v402 = vadd.f32 0.0, %v401
    %v403 = vpop.f32.mrb[0].mxu0
    %404 = vdwg.mxu0
    %v405 = vadd.f32 %v315, %v399
    %v406 = vadd.f32 %v318, %v402
    %v407 = vld [vmem:[#allocation2 + $0x8] sm:$0xe]
    %v408 = vld [vmem:[#allocation2 + $0xc] sm:$0xf]
    %v409 = vld [vmem:[#allocation2 + $0x10] sm:$0x1]
    %v410 = vld [vmem:[#allocation2 + $0x10] sm:$0x3]
    %v414 = vunpack.c.l.b16 %v407
    %v415 = vunpack.c.l.b16 %v408
    %v416 = vunpack.c.l.b16 %v410
    %v417 = vpack.c.b16 %v415, %v414
    %v418 = vpack.c.b16 %v416, %v416
    %vm419 = vsmask.f32 6400
    %v421 = vshrl.u32 %v417, 16
    %v423 = vrot.slane %v421, 1
    %v424 = vshll.u32 %v417, 16
    %v426 = vrot.slane %v424, 2
    %v427 = vor.u32 %v423, %v426
    %v429 = vshrl.u32 %v418, 16
    %v431 = vrot.slane %v429, 1
    %v432 = vshll.u32 %v418, 16
    %v434 = vrot.slane %v432, 2
    %v435 = vor.u32 %v431, %v434
    %v436 = vsel %vm419, %v427, %v435
    %v438 = vsel %vm209, %v436, 0
    %440 = vmatprep.subr.bf16.mxu0 0
    %441 = vmatpush1.bf16.msra.mxu0 %v201
    %442 = vmatprep.subr.bf16.mxu0 0
    %443 = vmatpush1.bf16.msra.mxu0 %v202
    %444 = vmatprep.subr.bf16.mxu0 0
    %445 = vmatpush1.bf16.msra.mxu0 %v203
    %446 = vmatprep.subr.bf16.mxu0 0
    %447 = vmatpush1.bf16.msra.mxu0 %v204
    %448 = vmatprep.subr.bf16.mxu0 0
    %449 = vmatpush1.bf16.msra.mxu0 0
    %450 = vmatprep.subr.bf16.mxu0 0
    %451 = vmatpush1.bf16.msra.mxu0 0
    %452 = vmatprep.subr.bf16.mxu0 0
    %453 = vmatpush1.bf16.msra.mxu0 0
    %454 = vmatprep.subr.bf16.mxu0 0
    %455 = vmatpush1.bf16.msra.mxu0 0
    %456 = vmatprep.subr.bf16.mxu0 0
    %457 = vmatpush1.bf16.msra.mxu0 0
    %458 = vmatprep.subr.bf16.mxu0 0
    %459 = vmatpush1.bf16.msra.mxu0 0
    %460 = vmatprep.subr.bf16.mxu0 0
    %461 = vmatpush1.bf16.msra.mxu0 0
    %462 = vmatprep.subr.bf16.mxu0 0
    %463 = vmatpush1.bf16.msra.mxu0 0
    %464 = vmatprep.subr.bf16.mxu0 0
    %465 = vmatpush1.bf16.msra.mxu0 0
    %466 = vmatprep.subr.bf16.mxu0 0
    %467 = vmatpush1.bf16.msra.mxu0 0
    %468 = vmatprep.subr.bf16.mxu0 0
    %469 = vmatpush1.bf16.msra.mxu0 0
    %470 = vmatprep.subr.bf16.mxu0 0
    %471 = vmatpush1.bf16.msra.mxu0 0
    %472 = vmatprep.mubr.bf16.mxu0 0
    %473 = vmatmul.mubr.bf16.gmra.mrb[0].mxu0 %v438
    %v474 = vpop.f32.mrb[0].mxu0
    %v475 = vadd.f32 0.0, %v474
    %v476 = vpop.f32.mrb[0].mxu0
    %v477 = vpop.f32.mrb[0].mxu0
    %v478 = vadd.f32 0.0, %v477
    %v479 = vpop.f32.mrb[0].mxu0
    %480 = vdwg.mxu0
    %v482 = vunpack.c.l.b16 %v409
    %v483 = vpack.c.b16 %v482, %v482
    %v484 = vrot.slane %v417, 1
    %v485 = vrot.slane %v483, 1
    %v486 = vsel %vm333, %v484, %v485
    %v488 = vsel %vm209, %v486, 0
    %490 = vmatprep.subr.bf16.mxu0 0
    %491 = vmatpush1.bf16.msra.mxu0 %v270
    %492 = vmatprep.subr.bf16.mxu0 0
    %493 = vmatpush1.bf16.msra.mxu0 %v271
    %494 = vmatprep.subr.bf16.mxu0 0
    %495 = vmatpush1.bf16.msra.mxu0 %v272
    %496 = vmatprep.subr.bf16.mxu0 0
    %497 = vmatpush1.bf16.msra.mxu0 %v273
    %498 = vmatprep.subr.bf16.mxu0 0
    %499 = vmatpush1.bf16.msra.mxu0 0
    %500 = vmatprep.subr.bf16.mxu0 0
    %501 = vmatpush1.bf16.msra.mxu0 0
    %502 = vmatprep.subr.bf16.mxu0 0
    %503 = vmatpush1.bf16.msra.mxu0 0
    %504 = vmatprep.subr.bf16.mxu0 0
    %505 = vmatpush1.bf16.msra.mxu0 0
    %506 = vmatprep.subr.bf16.mxu0 0
    %507 = vmatpush1.bf16.msra.mxu0 0
    %508 = vmatprep.subr.bf16.mxu0 0
    %509 = vmatpush1.bf16.msra.mxu0 0
    %510 = vmatprep.subr.bf16.mxu0 0
    %511 = vmatpush1.bf16.msra.mxu0 0
    %512 = vmatprep.subr.bf16.mxu0 0
    %513 = vmatpush1.bf16.msra.mxu0 0
    %514 = vmatprep.subr.bf16.mxu0 0
    %515 = vmatpush1.bf16.msra.mxu0 0
    %516 = vmatprep.subr.bf16.mxu0 0
    %517 = vmatpush1.bf16.msra.mxu0 0
    %518 = vmatprep.subr.bf16.mxu0 0
    %519 = vmatpush1.bf16.msra.mxu0 0
    %520 = vmatprep.subr.bf16.mxu0 0
    %521 = vmatpush1.bf16.msra.mxu0 0
    %522 = vmatprep.mubr.bf16.mxu0 0
    %523 = vmatmul.mubr.bf16.gmra.mrb[0].mxu0 %v488
    %v524 = vpop.f32.mrb[0].mxu0
    %v525 = vadd.f32 %v475, %v524
    %v526 = vpop.f32.mrb[0].mxu0
    %v527 = vpop.f32.mrb[0].mxu0
    %v528 = vadd.f32 %v478, %v527
    %v529 = vpop.f32.mrb[0].mxu0
    %530 = vdwg.mxu0
    %v531 = vld [vmem:[#allocation2 + $0x8] sm:$0xc]
    %v533 = vunpack.c.l.b16 %v531
    %v534 = vpack.c.b16 %v415, %v533
    %vm535 = vcmask 1045504
    %v536 = vrot.slane %v534, 2
    %v537 = vrot.slane %v418, 2
    %v538 = vsel %vm535, %v536, %v537
    %v540 = vsel %vm209, %v538, 0
    %542 = vmatprep.subr.bf16.mxu0 0
    %543 = vmatpush1.bf16.msra.mxu0 %v353
    %544 = vmatprep.subr.bf16.mxu0 0
    %545 = vmatpush1.bf16.msra.mxu0 %v354
    %546 = vmatprep.subr.bf16.mxu0 0
    %547 = vmatpush1.bf16.msra.mxu0 %v355
    %548 = vmatprep.subr.bf16.mxu0 0
    %549 = vmatpush1.bf16.msra.mxu0 %v356
    %550 = vmatprep.subr.bf16.mxu0 0
    %551 = vmatpush1.bf16.msra.mxu0 0
    %552 = vmatprep.subr.bf16.mxu0 0
    %553 = vmatpush1.bf16.msra.mxu0 0
    %554 = vmatprep.subr.bf16.mxu0 0
    %555 = vmatpush1.bf16.msra.mxu0 0
    %556 = vmatprep.subr.bf16.mxu0 0
    %557 = vmatpush1.bf16.msra.mxu0 0
    %558 = vmatprep.subr.bf16.mxu0 0
    %559 = vmatpush1.bf16.msra.mxu0 0
    %560 = vmatprep.subr.bf16.mxu0 0
    %561 = vmatpush1.bf16.msra.mxu0 0
    %562 = vmatprep.subr.bf16.mxu0 0
    %563 = vmatpush1.bf16.msra.mxu0 0
    %564 = vmatprep.subr.bf16.mxu0 0
    %565 = vmatpush1.bf16.msra.mxu0 0
    %566 = vmatprep.subr.bf16.mxu0 0
    %567 = vmatpush1.bf16.msra.mxu0 0
    %568 = vmatprep.subr.bf16.mxu0 0
    %569 = vmatpush1.bf16.msra.mxu0 0
    %570 = vmatprep.subr.bf16.mxu0 0
    %571 = vmatpush1.bf16.msra.mxu0 0
    %572 = vmatprep.subr.bf16.mxu0 0
    %573 = vmatpush1.bf16.msra.mxu0 0
    %574 = vmatprep.mubr.bf16.mxu0 0
    %575 = vmatmul.mubr.bf16.gmra.mrb[0].mxu0 %v540
    %v576 = vpop.f32.mrb[0].mxu0
    %v577 = vadd.f32 0.0, %v576
    %v578 = vpop.f32.mrb[0].mxu0
    %v579 = vpop.f32.mrb[0].mxu0
    %v580 = vadd.f32 0.0, %v579
    %v581 = vpop.f32.mrb[0].mxu0
    %582 = vdwg.mxu0
    %v583 = vadd.f32 %v525, %v577
    %v584 = vadd.f32 %v528, %v580
    %v585 = vadd.f32 %v405, %v406
    %v586 = vrot.slane %v585, 4
    %v587 = vadd.f32 %v585, %v586
    %v588 = vrot.slane %v587, 2
    %v589 = vadd.f32 %v587, %v588
    %v590 = vrot.slane %v589, 1
    %v591 = vadd.f32 %v589, %v590
    %v592 = vadd.f32 %v591, 0.0
    %v593 = vmul.f32 %v405, %v405
    %v594 = vmul.f32 %v406, %v406
    %v595 = vadd.f32 %v593, %v594
    %v596 = vrot.slane %v595, 4
    %v597 = vadd.f32 %v595, %v596
    %v598 = vrot.slane %v597, 2
    %v599 = vadd.f32 %v597, %v598
    %v600 = vrot.slane %v599, 1
    %v601 = vadd.f32 %v599, %v600
    %v602 = vadd.f32 %v601, 0.0
    %v603 = vadd.f32 %v583, %v584
    %v604 = vrot.slane %v603, 4
    %v605 = vadd.f32 %v603, %v604
    %v606 = vrot.slane %v605, 2
    %v607 = vadd.f32 %v605, %v606
    %v608 = vrot.slane %v607, 1
    %v609 = vadd.f32 %v607, %v608
    %v610 = vadd.f32 %v592, %v609
    %v611 = vmul.f32 %v583, %v583
    %v612 = vmul.f32 %v584, %v584
    %v613 = vadd.f32 %v611, %v612
    %v614 = vrot.slane %v613, 4
    %v615 = vadd.f32 %v613, %v614
    %v616 = vrot.slane %v615, 2
    %v617 = vadd.f32 %v615, %v616
    %v618 = vrot.slane %v617, 1
    %v619 = vadd.f32 %v617, %v618
    %v620 = vadd.f32 %v602, %v619
    %v621 = vld [vmem:[%s7] sm:$0xff]
    %v622 = vld [vmem:[%s7 + $0x8] sm:$0xff]
    %v623 = vld [vmem:[%s7 + $0x10] sm:$0xff]
    %v624 = vld [vmem:[%s7 + $0x18] sm:$0xff]
    %v625 = vld [vmem:[%s7 + $0x20] sm:$0xff]
    %v626 = vld [vmem:[%s7 + $0x28] sm:$0xff]
    %v627 = vld [vmem:[%s7 + $0x30] sm:$0xff]
    %v628 = vld [vmem:[%s7 + $0x38] sm:$0xff]
    %v629 = vld [vmem:[%s7 + $0x40] sm:$0xff]
    %v630 = vld [vmem:[%s7 + $0x48] sm:$0xff]
    %v631 = vld [vmem:[%s7 + $0x50] sm:$0xff]
    %v632 = vld [vmem:[%s7 + $0x58] sm:$0xff]
    %v633 = vld [vmem:[%s7 + $0x60] sm:$0xff]
    %v634 = vld [vmem:[%s7 + $0x68] sm:$0xff]
    %v635 = vld [vmem:[%s7 + $0x70] sm:$0xff]
    %v636 = vld [vmem:[%s7 + $0x78] sm:$0xff]
    %637 = vmatprep.subr.mxu0 0.0
    %638 = vmatpush1.msra.mxu0 %v621
    %639 = vmatprep.subr.mxu0 0.0
    %640 = vmatpush1.msra.mxu0 %v622
    %641 = vmatprep.subr.mxu0 0.0
    %642 = vmatpush1.msra.mxu0 %v623
    %643 = vmatprep.subr.mxu0 0.0
    %644 = vmatpush1.msra.mxu0 %v624
    %645 = vmatprep.subr.mxu0 0.0
    %646 = vmatpush1.msra.mxu0 %v625
    %647 = vmatprep.subr.mxu0 0.0
    %648 = vmatpush1.msra.mxu0 %v626
    %649 = vmatprep.subr.mxu0 0.0
    %650 = vmatpush1.msra.mxu0 %v627
    %651 = vmatprep.subr.mxu0 0.0
    %652 = vmatpush1.msra.mxu0 %v628
    %653 = vmatprep.subr.mxu0 0.0
    %654 = vmatpush1.msra.mxu0 %v629
    %655 = vmatprep.subr.mxu0 0.0
    %656 = vmatpush1.msra.mxu0 %v630
    %657 = vmatprep.subr.mxu0 0.0
    %658 = vmatpush1.msra.mxu0 %v631
    %659 = vmatprep.subr.mxu0 0.0
    %660 = vmatpush1.msra.mxu0 %v632
    %661 = vmatprep.subr.mxu0 0.0
    %662 = vmatpush1.msra.mxu0 %v633
    %663 = vmatprep.subr.mxu0 0.0
    %664 = vmatpush1.msra.mxu0 %v634
    %665 = vmatprep.subr.mxu0 0.0
    %666 = vmatpush1.msra.mxu0 %v635
    %667 = vmatprep.subr.mxu0 0.0
    %668 = vmatpush1.msra.mxu0 %v636
    %669 = vmatprep.subr.mxu0 0.0
    %670 = vmatpush1.msra.mxu0 0.0
    %671 = vmatprep.subr.mxu0 0.0
    %672 = vmatpush1.msra.mxu0 0.0
    %673 = vmatprep.subr.mxu0 0.0
    %674 = vmatpush1.msra.mxu0 0.0
    %675 = vmatprep.subr.mxu0 0.0
    %676 = vmatpush1.msra.mxu0 0.0
    %677 = vmatprep.subr.mxu0 0.0
    %678 = vmatpush1.msra.mxu0 0.0
    %679 = vmatprep.subr.mxu0 0.0
    %680 = vmatpush1.msra.mxu0 0.0
    %681 = vmatprep.subr.mxu0 0.0
    %682 = vmatpush1.msra.mxu0 0.0
    %683 = vmatprep.subr.mxu0 0.0
    %684 = vmatpush1.msra.mxu0 0.0
    %685 = vmatprep.subr.mxu0 0.0
    %686 = vmatpush1.msra.mxu0 0.0
    %687 = vmatprep.subr.mxu0 0.0
    %688 = vmatpush1.msra.mxu0 0.0
    %689 = vmatprep.subr.mxu0 0.0
    %690 = vmatpush1.msra.mxu0 0.0
    %691 = vmatprep.subr.mxu0 0.0
    %692 = vmatpush1.msra.mxu0 0.0
    %693 = vmatprep.subr.mxu0 0.0
    %694 = vmatpush1.msra.mxu0 0.0
    %695 = vmatprep.subr.mxu0 0.0
    %696 = vmatpush1.msra.mxu0 0.0
    %697 = vmatprep.subr.mxu0 0.0
    %698 = vmatpush1.msra.mxu0 0.0
    %699 = vmatprep.subr.mxu0 0.0
    %700 = vmatpush1.msra.mxu0 0.0
    %701 = vmatprep.mubr.f32.mxu0 0.0
    %702 = vmatmul.mubr.f32.gmra.mrb[0].mxu0 %v610
    %v703 = vpop.f32.mrb[0].mxu0
    %v704 = vadd.f32 0.0, %v703
    %v705 = vpop.f32.mrb[0].mxu0
    %706 = vdwg.mxu0
    %707 = vmatprep.subr.mxu0 0.0
    %708 = vmatpush1.msra.mxu0 %v621
    %709 = vmatprep.subr.mxu0 0.0
    %710 = vmatpush1.msra.mxu0 %v622
    %711 = vmatprep.subr.mxu0 0.0
    %712 = vmatpush1.msra.mxu0 %v623
    %713 = vmatprep.subr.mxu0 0.0
    %714 = vmatpush1.msra.mxu0 %v624
    %715 = vmatprep.subr.mxu0 0.0
    %716 = vmatpush1.msra.mxu0 %v625
    %717 = vmatprep.subr.mxu0 0.0
    %718 = vmatpush1.msra.mxu0 %v626
    %719 = vmatprep.subr.mxu0 0.0
    %720 = vmatpush1.msra.mxu0 %v627
    %721 = vmatprep.subr.mxu0 0.0
    %722 = vmatpush1.msra.mxu0 %v628
    %723 = vmatprep.subr.mxu0 0.0
    %724 = vmatpush1.msra.mxu0 %v629
    %725 = vmatprep.subr.mxu0 0.0
    %726 = vmatpush1.msra.mxu0 %v630
    %727 = vmatprep.subr.mxu0 0.0
    %728 = vmatpush1.msra.mxu0 %v631
    %729 = vmatprep.subr.mxu0 0.0
    %730 = vmatpush1.msra.mxu0 %v632
    %731 = vmatprep.subr.mxu0 0.0
    %732 = vmatpush1.msra.mxu0 %v633
    %733 = vmatprep.subr.mxu0 0.0
    %734 = vmatpush1.msra.mxu0 %v634
    %735 = vmatprep.subr.mxu0 0.0
    %736 = vmatpush1.msra.mxu0 %v635
    %737 = vmatprep.subr.mxu0 0.0
    %738 = vmatpush1.msra.mxu0 %v636
    %739 = vmatprep.subr.mxu0 0.0
    %740 = vmatpush1.msra.mxu0 0.0
    %741 = vmatprep.subr.mxu0 0.0
    %742 = vmatpush1.msra.mxu0 0.0
    %743 = vmatprep.subr.mxu0 0.0
    %744 = vmatpush1.msra.mxu0 0.0
    %745 = vmatprep.subr.mxu0 0.0
    %746 = vmatpush1.msra.mxu0 0.0
    %747 = vmatprep.subr.mxu0 0.0
    %748 = vmatpush1.msra.mxu0 0.0
    %749 = vmatprep.subr.mxu0 0.0
    %750 = vmatpush1.msra.mxu0 0.0
    %751 = vmatprep.subr.mxu0 0.0
    %752 = vmatpush1.msra.mxu0 0.0
    %753 = vmatprep.subr.mxu0 0.0
    %754 = vmatpush1.msra.mxu0 0.0
    %755 = vmatprep.subr.mxu0 0.0
    %756 = vmatpush1.msra.mxu0 0.0
    %757 = vmatprep.subr.mxu0 0.0
    %758 = vmatpush1.msra.mxu0 0.0
    %759 = vmatprep.subr.mxu0 0.0
    %760 = vmatpush1.msra.mxu0 0.0
    %761 = vmatprep.subr.mxu0 0.0
    %762 = vmatpush1.msra.mxu0 0.0
    %763 = vmatprep.subr.mxu0 0.0
    %764 = vmatpush1.msra.mxu0 0.0
    %765 = vmatprep.subr.mxu0 0.0
    %766 = vmatpush1.msra.mxu0 0.0
    %767 = vmatprep.subr.mxu0 0.0
    %768 = vmatpush1.msra.mxu0 0.0
    %769 = vmatprep.subr.mxu0 0.0
    %770 = vmatpush1.msra.mxu0 0.0
    %771 = vmatprep.mubr.f32.mxu0 0.0
    %772 = vmatmul.mubr.f32.gmra.mrb[0].mxu0 %v620
    %v773 = vpop.f32.mrb[0].mxu0
    %v774 = vadd.f32 0.0, %v773
    %v775 = vpop.f32.mrb[0].mxu0
    %776 = vdwg.mxu0
    %v777 = vmul.f32 %v704, 0.001953125
    %v778 = vmul.f32 %v774, 0.001953125
    %v779 = vmul.f32 %v777, %v777
    %v780 = vsub.f32 %v778, %v779
    %v781 = vadd.f32 %v780, 1e-05
    %v782 = vrsqrt.pop %v781
    %v783 = vld [vmem:[%s3] sm:$0x1]
    %v784 = vmul.f32 %v783, %v782
    %v785 = vld [vmem:[%s4] sm:$0x1]
    %v786 = vmul.f32 %v777, %v784
    %v787 = vsub.f32 %v785, %v786
    %v788 = vld [vmem:[%s8] sm:$0xff]
    %vm789 = vcmask 64512
    %v791 = vsel %vm789, %v784, 0
    %793 = vmatprep.subr.mxu0 0.0
    %794 = vmatpush1.msra.mxu0 %v788
    %795 = vmatprep.subr.mxu0 0.0
    %796 = vmatpush1.msra.mxu0 0.0
    %797 = vmatprep.subr.mxu0 0.0
    %798 = vmatpush1.msra.mxu0 0.0
    %799 = vmatprep.subr.mxu0 0.0
    %800 = vmatpush1.msra.mxu0 0.0
    %801 = vmatprep.subr.mxu0 0.0
    %802 = vmatpush1.msra.mxu0 0.0
    %803 = vmatprep.subr.mxu0 0.0
    %804 = vmatpush1.msra.mxu0 0.0
    %805 = vmatprep.subr.mxu0 0.0
    %806 = vmatpush1.msra.mxu0 0.0
    %807 = vmatprep.subr.mxu0 0.0
    %808 = vmatpush1.msra.mxu0 0.0
    %809 = vmatprep.subr.mxu0 0.0
    %810 = vmatpush1.msra.mxu0 0.0
    %811 = vmatprep.subr.mxu0 0.0
    %812 = vmatpush1.msra.mxu0 0.0
    %813 = vmatprep.subr.mxu0 0.0
    %814 = vmatpush1.msra.mxu0 0.0
    %815 = vmatprep.subr.mxu0 0.0
    %816 = vmatpush1.msra.mxu0 0.0
    %817 = vmatprep.subr.mxu0 0.0
    %818 = vmatpush1.msra.mxu0 0.0
    %819 = vmatprep.subr.mxu0 0.0
    %820 = vmatpush1.msra.mxu0 0.0
    %821 = vmatprep.subr.mxu0 0.0
    %822 = vmatpush1.msra.mxu0 0.0
    %823 = vmatprep.subr.mxu0 0.0
    %824 = vmatpush1.msra.mxu0 0.0
    %825 = vmatprep.subr.mxu0 0.0
    %826 = vmatpush1.msra.mxu0 0.0
    %827 = vmatprep.subr.mxu0 0.0
    %828 = vmatpush1.msra.mxu0 0.0
    %829 = vmatprep.subr.mxu0 0.0
    %830 = vmatpush1.msra.mxu0 0.0
    %831 = vmatprep.subr.mxu0 0.0
    %832 = vmatpush1.msra.mxu0 0.0
    %833 = vmatprep.subr.mxu0 0.0
    %834 = vmatpush1.msra.mxu0 0.0
    %835 = vmatprep.subr.mxu0 0.0
    %836 = vmatpush1.msra.mxu0 0.0
    %837 = vmatprep.subr.mxu0 0.0
    %838 = vmatpush1.msra.mxu0 0.0
    %839 = vmatprep.subr.mxu0 0.0
    %840 = vmatpush1.msra.mxu0 0.0
    %841 = vmatprep.subr.mxu0 0.0
    %842 = vmatpush1.msra.mxu0 0.0
    %843 = vmatprep.subr.mxu0 0.0
    %844 = vmatpush1.msra.mxu0 0.0
    %845 = vmatprep.subr.mxu0 0.0
    %846 = vmatpush1.msra.mxu0 0.0
    %847 = vmatprep.subr.mxu0 0.0
    %848 = vmatpush1.msra.mxu0 0.0
    %849 = vmatprep.subr.mxu0 0.0
    %850 = vmatpush1.msra.mxu0 0.0
    %851 = vmatprep.subr.mxu0 0.0
    %852 = vmatpush1.msra.mxu0 0.0
    %853 = vmatprep.subr.mxu0 0.0
    %854 = vmatpush1.msra.mxu0 0.0
    %855 = vmatprep.subr.mxu0 0.0
    %856 = vmatpush1.msra.mxu0 0.0
    %857 = vmatprep.mubr.f32.mxu0 0.0
    %858 = vmatmul.mubr.f32.gmra.mrb[0].mxu0 %v791
    %v859 = vpop.f32.mrb[0].mxu0
    %v860 = vadd.f32 0.0, %v859
    %v861 = vpop.f32.mrb[0].mxu0
    %862 = vdwg.mxu0
    %v864 = vsel %vm789, %v787, 0
    %866 = vmatprep.subr.mxu0 0.0
    %867 = vmatpush1.msra.mxu0 %v788
    %868 = vmatprep.subr.mxu0 0.0
    %869 = vmatpush1.msra.mxu0 0.0
    %870 = vmatprep.subr.mxu0 0.0
    %871 = vmatpush1.msra.mxu0 0.0
    %872 = vmatprep.subr.mxu0 0.0
    %873 = vmatpush1.msra.mxu0 0.0
    %874 = vmatprep.subr.mxu0 0.0
    %875 = vmatpush1.msra.mxu0 0.0
    %876 = vmatprep.subr.mxu0 0.0
    %877 = vmatpush1.msra.mxu0 0.0
    %878 = vmatprep.subr.mxu0 0.0
    %879 = vmatpush1.msra.mxu0 0.0
    %880 = vmatprep.subr.mxu0 0.0
    %881 = vmatpush1.msra.mxu0 0.0
    %882 = vmatprep.subr.mxu0 0.0
    %883 = vmatpush1.msra.mxu0 0.0
    %884 = vmatprep.subr.mxu0 0.0
    %885 = vmatpush1.msra.mxu0 0.0
    %886 = vmatprep.subr.mxu0 0.0
    %887 = vmatpush1.msra.mxu0 0.0
    %888 = vmatprep.subr.mxu0 0.0
    %889 = vmatpush1.msra.mxu0 0.0
    %890 = vmatprep.subr.mxu0 0.0
    %891 = vmatpush1.msra.mxu0 0.0
    %892 = vmatprep.subr.mxu0 0.0
    %893 = vmatpush1.msra.mxu0 0.0
    %894 = vmatprep.subr.mxu0 0.0
    %895 = vmatpush1.msra.mxu0 0.0
    %896 = vmatprep.subr.mxu0 0.0
    %897 = vmatpush1.msra.mxu0 0.0
    %898 = vmatprep.subr.mxu0 0.0
    %899 = vmatpush1.msra.mxu0 0.0
    %900 = vmatprep.subr.mxu0 0.0
    %901 = vmatpush1.msra.mxu0 0.0
    %902 = vmatprep.subr.mxu0 0.0
    %903 = vmatpush1.msra.mxu0 0.0
    %904 = vmatprep.subr.mxu0 0.0
    %905 = vmatpush1.msra.mxu0 0.0
    %906 = vmatprep.subr.mxu0 0.0
    %907 = vmatpush1.msra.mxu0 0.0
    %908 = vmatprep.subr.mxu0 0.0
    %909 = vmatpush1.msra.mxu0 0.0
    %910 = vmatprep.subr.mxu0 0.0
    %911 = vmatpush1.msra.mxu0 0.0
    %912 = vmatprep.subr.mxu0 0.0
    %913 = vmatpush1.msra.mxu0 0.0
    %914 = vmatprep.subr.mxu0 0.0
    %915 = vmatpush1.msra.mxu0 0.0
    %916 = vmatprep.subr.mxu0 0.0
    %917 = vmatpush1.msra.mxu0 0.0
    %918 = vmatprep.subr.mxu0 0.0
    %919 = vmatpush1.msra.mxu0 0.0
    %920 = vmatprep.subr.mxu0 0.0
    %921 = vmatpush1.msra.mxu0 0.0
    %922 = vmatprep.subr.mxu0 0.0
    %923 = vmatpush1.msra.mxu0 0.0
    %924 = vmatprep.subr.mxu0 0.0
    %925 = vmatpush1.msra.mxu0 0.0
    %926 = vmatprep.subr.mxu0 0.0
    %927 = vmatpush1.msra.mxu0 0.0
    %928 = vmatprep.subr.mxu0 0.0
    %929 = vmatpush1.msra.mxu0 0.0
    %930 = vmatprep.mubr.f32.mxu0 0.0
    %931 = vmatmul.mubr.f32.gmra.mrb[0].mxu0 %v864
    %v932 = vpop.f32.mrb[0].mxu0
    %v933 = vadd.f32 0.0, %v932
    %v934 = vpop.f32.mrb[0].mxu0
    %935 = vdwg.mxu0
    %v936 = vlaneseq
    %v937 = vshrl.u32 %v936, 7
    %v938 = vsub.s32 0, %v937
    %v939 = vrot.slane %v860, %v938
    %v940 = vmul.f32 %v405, %v939
    %v941 = vmul.f32 %v406, %v939
    %v942 = vlaneseq
    %v943 = vshrl.u32 %v942, 7
    %v944 = vsub.s32 0, %v943
    %v945 = vrot.slane %v933, %v944
    %v946 = vadd.f32 %v940, %v945
    %v947 = vadd.f32 %v941, %v945
    %v948 = vmax.f32 %v946, 0.0
    %v949 = vmax.f32 %v947, 0.0
    %v950 = vmul.f32 %v583, %v939
    %v951 = vmul.f32 %v584, %v939
    %v952 = vadd.f32 %v950, %v945
    %v953 = vadd.f32 %v951, %v945
    %v954 = vmax.f32 %v952, 0.0
    %v955 = vmax.f32 %v953, 0.0
    %956 = vst [vmem:[#allocation3 + $0x1] sm:$0xff] %v948
    %957 = vst [vmem:[#allocation3 + $0x9] sm:$0xff] %v949
    %958 = vst [vmem:[#allocation3 + $0x13] sm:$0xff] %v954
    %959 = vst [vmem:[#allocation3 + $0x1b] sm:$0xff] %v955
    %v960 = vld [vmem:[#allocation3] sm:$0xff]
    %v961 = vld [vmem:[#allocation3 + $0x8] sm:$0xff]
    %v962 = vld [vmem:[#allocation4] sm:$0xff]
    %v963 = vld [vmem:[#allocation4 + $0x8] sm:$0xff]
    %v964 = vld [vmem:[#allocation4 + $0x10] sm:$0xff]
    %v965 = vld [vmem:[#allocation4 + $0x18] sm:$0xff]
    %v966 = vld [vmem:[#allocation4 + $0x20] sm:$0xff]
    %v967 = vld [vmem:[#allocation4 + $0x28] sm:$0xff]
    %v968 = vld [vmem:[#allocation4 + $0x30] sm:$0xff]
    %v969 = vld [vmem:[#allocation4 + $0x38] sm:$0xff]
    %v970 = vld [vmem:[#allocation4 + $0x40] sm:$0xff]
    %v971 = vld [vmem:[#allocation4 + $0x48] sm:$0xff]
    %v972 = vld [vmem:[#allocation4 + $0x50] sm:$0xff]
    %v973 = vld [vmem:[#allocation4 + $0x58] sm:$0xff]
    %v974 = vld [vmem:[#allocation4 + $0x60] sm:$0xff]
    %v975 = vld [vmem:[#allocation4 + $0x68] sm:$0xff]
    %v976 = vld [vmem:[#allocation4 + $0x70] sm:$0xff]
    %v977 = vld [vmem:[#allocation4 + $0x78] sm:$0xff]
    %v978 = vld [vmem:[#allocation3 + $0x1] sm:$0xff]
    %v979 = vld [vmem:[#allocation3 + $0x9] sm:$0xff]
    %v980 = vld [vmem:[#allocation4 + $0x80] sm:$0xff]
    %v981 = vld [vmem:[#allocation4 + $0x88] sm:$0xff]
    %v982 = vld [vmem:[#allocation4 + $0x90] sm:$0xff]
    %v983 = vld [vmem:[#allocation4 + $0x98] sm:$0xff]
    %v984 = vld [vmem:[#allocation4 + $0xa0] sm:$0xff]
    %v985 = vld [vmem:[#allocation4 + $0xa8] sm:$0xff]
    %v986 = vld [vmem:[#allocation4 + $0xb0] sm:$0xff]
    %v987 = vld [vmem:[#allocation4 + $0xb8] sm:$0xff]
    %v988 = vld [vmem:[#allocation4 + $0xc0] sm:$0xff]
    %v989 = vld [vmem:[#allocation4 + $0xc8] sm:$0xff]
    %v990 = vld [vmem:[#allocation4 + $0xd0] sm:$0xff]
    %v991 = vld [vmem:[#allocation4 + $0xd8] sm:$0xff]
    %v992 = vld [vmem:[#allocation4 + $0xe0] sm:$0xff]
    %v993 = vld [vmem:[#allocation4 + $0xe8] sm:$0xff]
    %v994 = vld [vmem:[#allocation4 + $0xf0] sm:$0xff]
    %v995 = vld [vmem:[#allocation4 + $0xf8] sm:$0xff]
    %996 = vmatprep.subr.mxu0 0.0
    %997 = vmatpush1.msra.mxu0 %v980
    %998 = vmatprep.subr.mxu0 0.0
    %999 = vmatpush1.msra.mxu0 %v981
    %1000 = vmatprep.subr.mxu0 0.0
    %1001 = vmatpush1.msra.mxu0 %v982
    %1002 = vmatprep.subr.mxu0 0.0
    %1003 = vmatpush1.msra.mxu0 %v983
    %1004 = vmatprep.subr.mxu0 0.0
    %1005 = vmatpush1.msra.mxu0 %v984
    %1006 = vmatprep.subr.mxu0 0.0
    %1007 = vmatpush1.msra.mxu0 %v985
    %1008 = vmatprep.subr.mxu0 0.0
    %1009 = vmatpush1.msra.mxu0 %v986
    %1010 = vmatprep.subr.mxu0 0.0
    %1011 = vmatpush1.msra.mxu0 %v987
    %1012 = vmatprep.subr.mxu0 0.0
    %1013 = vmatpush1.msra.mxu0 %v988
    %1014 = vmatprep.subr.mxu0 0.0
    %1015 = vmatpush1.msra.mxu0 %v989
    %1016 = vmatprep.subr.mxu0 0.0
    %1017 = vmatpush1.msra.mxu0 %v990
    %1018 = vmatprep.subr.mxu0 0.0
    %1019 = vmatpush1.msra.mxu0 %v991
    %1020 = vmatprep.subr.mxu0 0.0
    %1021 = vmatpush1.msra.mxu0 %v992
    %1022 = vmatprep.subr.mxu0 0.0
    %1023 = vmatpush1.msra.mxu0 %v993
    %1024 = vmatprep.subr.mxu0 0.0
    %1025 = vmatpush1.msra.mxu0 %v994
    %1026 = vmatprep.subr.mxu0 0.0
    %1027 = vmatpush1.msra.mxu0 %v995
    %1028 = vmatprep.subr.mxu0 0.0
    %1029 = vmatpush1.msra.mxu0 0.0
    %1030 = vmatprep.subr.mxu0 0.0
    %1031 = vmatpush1.msra.mxu0 0.0
    %1032 = vmatprep.subr.mxu0 0.0
    %1033 = vmatpush1.msra.mxu0 0.0
    %1034 = vmatprep.subr.mxu0 0.0
    %1035 = vmatpush1.msra.mxu0 0.0
    %1036 = vmatprep.subr.mxu0 0.0
    %1037 = vmatpush1.msra.mxu0 0.0
    %1038 = vmatprep.subr.mxu0 0.0
    %1039 = vmatpush1.msra.mxu0 0.0
    %1040 = vmatprep.subr.mxu0 0.0
    %1041 = vmatpush1.msra.mxu0 0.0
    %1042 = vmatprep.subr.mxu0 0.0
    %1043 = vmatpush1.msra.mxu0 0.0
    %1044 = vmatprep.subr.mxu0 0.0
    %1045 = vmatpush1.msra.mxu0 0.0
    %1046 = vmatprep.subr.mxu0 0.0
    %1047 = vmatpush1.msra.mxu0 0.0
    %1048 = vmatprep.subr.mxu0 0.0
    %1049 = vmatpush1.msra.mxu0 0.0
    %1050 = vmatprep.subr.mxu0 0.0
    %1051 = vmatpush1.msra.mxu0 0.0
    %1052 = vmatprep.subr.mxu0 0.0
    %1053 = vmatpush1.msra.mxu0 0.0
    %1054 = vmatprep.subr.mxu0 0.0
    %1055 = vmatpush1.msra.mxu0 0.0
    %1056 = vmatprep.subr.mxu0 0.0
    %1057 = vmatpush1.msra.mxu0 0.0
    %1058 = vmatprep.subr.mxu0 0.0
    %1059 = vmatpush1.msra.mxu0 0.0
    %1060 = vmatprep.mubr.f32.mxu0 0.0
    %1061 = vmatmul.mubr.f32.gmra.mrb[0].mxu0 %v978
    %v1062 = vpop.f32.mrb[0].mxu0
    %v1063 = vadd.f32 0.0, %v1062
    %v1064 = vpop.f32.mrb[0].mxu0
    %1065 = vmatprep.mubr.f32.mxu0 0.0
    %1066 = vmatmul.mubr.f32.gmra.mrb[0].mxu0 %v979
    %v1067 = vpop.f32.mrb[0].mxu0
    %v1068 = vadd.f32 0.0, %v1067
    %v1069 = vpop.f32.mrb[0].mxu0
    %1070 = vdwg.mxu0
    %1071 = vmatprep.subr.mxu0 0.0
    %1072 = vmatpush1.msra.mxu0 %v962
    %1073 = vmatprep.subr.mxu0 0.0
    %1074 = vmatpush1.msra.mxu0 %v963
    %1075 = vmatprep.subr.mxu0 0.0
    %1076 = vmatpush1.msra.mxu0 %v964
    %1077 = vmatprep.subr.mxu0 0.0
    %1078 = vmatpush1.msra.mxu0 %v965
    %1079 = vmatprep.subr.mxu0 0.0
    %1080 = vmatpush1.msra.mxu0 %v966
    %1081 = vmatprep.subr.mxu0 0.0
    %1082 = vmatpush1.msra.mxu0 %v967
    %1083 = vmatprep.subr.mxu0 0.0
    %1084 = vmatpush1.msra.mxu0 %v968
    %1085 = vmatprep.subr.mxu0 0.0
    %1086 = vmatpush1.msra.mxu0 %v969
    %1087 = vmatprep.subr.mxu0 0.0
    %1088 = vmatpush1.msra.mxu0 %v970
    %1089 = vmatprep.subr.mxu0 0.0
    %1090 = vmatpush1.msra.mxu0 %v971
    %1091 = vmatprep.subr.mxu0 0.0
    %1092 = vmatpush1.msra.mxu0 %v972
    %1093 = vmatprep.subr.mxu0 0.0
    %1094 = vmatpush1.msra.mxu0 %v973
    %1095 = vmatprep.subr.mxu0 0.0
    %1096 = vmatpush1.msra.mxu0 %v974
    %1097 = vmatprep.subr.mxu0 0.0
    %1098 = vmatpush1.msra.mxu0 %v975
    %1099 = vmatprep.subr.mxu0 0.0
    %1100 = vmatpush1.msra.mxu0 %v976
    %1101 = vmatprep.subr.mxu0 0.0
    %1102 = vmatpush1.msra.mxu0 %v977
    %1103 = vmatprep.subr.mxu0 0.0
    %1104 = vmatpush1.msra.mxu0 0.0
    %1105 = vmatprep.subr.mxu0 0.0
    %1106 = vmatpush1.msra.mxu0 0.0
    %1107 = vmatprep.subr.mxu0 0.0
    %1108 = vmatpush1.msra.mxu0 0.0
    %1109 = vmatprep.subr.mxu0 0.0
    %1110 = vmatpush1.msra.mxu0 0.0
    %1111 = vmatprep.subr.mxu0 0.0
    %1112 = vmatpush1.msra.mxu0 0.0
    %1113 = vmatprep.subr.mxu0 0.0
    %1114 = vmatpush1.msra.mxu0 0.0
    %1115 = vmatprep.subr.mxu0 0.0
    %1116 = vmatpush1.msra.mxu0 0.0
    %1117 = vmatprep.subr.mxu0 0.0
    %1118 = vmatpush1.msra.mxu0 0.0
    %1119 = vmatprep.subr.mxu0 0.0
    %1120 = vmatpush1.msra.mxu0 0.0
    %1121 = vmatprep.subr.mxu0 0.0
    %1122 = vmatpush1.msra.mxu0 0.0
    %1123 = vmatprep.subr.mxu0 0.0
    %1124 = vmatpush1.msra.mxu0 0.0
    %1125 = vmatprep.subr.mxu0 0.0
    %1126 = vmatpush1.msra.mxu0 0.0
    %1127 = vmatprep.subr.mxu0 0.0
    %1128 = vmatpush1.msra.mxu0 0.0
    %1129 = vmatprep.subr.mxu0 0.0
    %1130 = vmatpush1.msra.mxu0 0.0
    %1131 = vmatprep.subr.mxu0 0.0
    %1132 = vmatpush1.msra.mxu0 0.0
    %1133 = vmatprep.subr.mxu0 0.0
    %1134 = vmatpush1.msra.mxu0 0.0
    %1135 = vmatprep.mubr.f32.mxu0 0.0
    %1136 = vmatmul.mubr.f32.gmra.mrb[0].mxu0 %v960
    %v1137 = vpop.f32.mrb[0].mxu0
    %v1138 = vadd.f32 %v1063, %v1137
    %v1139 = vpop.f32.mrb[0].mxu0
    %1140 = vmatprep.mubr.f32.mxu0 0.0
    %1141 = vmatmul.mubr.f32.gmra.mrb[0].mxu0 %v961
    %v1142 = vpop.f32.mrb[0].mxu0
    %v1143 = vadd.f32 %v1068, %v1142
    %v1144 = vpop.f32.mrb[0].mxu0
    %1145 = vdwg.mxu0
    %v1146 = vld [vmem:[#allocation3 + $0x2] sm:$0xff]
    %v1147 = vld [vmem:[#allocation3 + $0xa] sm:$0xff]
    %v1148 = vld [vmem:[#allocation4 + $0x100] sm:$0xff]
    %v1149 = vld [vmem:[#allocation4 + $0x108] sm:$0xff]
    %v1150 = vld [vmem:[#allocation4 + $0x110] sm:$0xff]
    %v1151 = vld [vmem:[#allocation4 + $0x118] sm:$0xff]
    %v1152 = vld [vmem:[#allocation4 + $0x120] sm:$0xff]
    %v1153 = vld [vmem:[#allocation4 + $0x128] sm:$0xff]
    %v1154 = vld [vmem:[#allocation4 + $0x130] sm:$0xff]
    %v1155 = vld [vmem:[#allocation4 + $0x138] sm:$0xff]
    %v1156 = vld [vmem:[#allocation4 + $0x140] sm:$0xff]
    %v1157 = vld [vmem:[#allocation4 + $0x148] sm:$0xff]
    %v1158 = vld [vmem:[#allocation4 + $0x150] sm:$0xff]
    %v1159 = vld [vmem:[#allocation4 + $0x158] sm:$0xff]
    %v1160 = vld [vmem:[#allocation4 + $0x160] sm:$0xff]
    %v1161 = vld [vmem:[#allocation4 + $0x168] sm:$0xff]
    %v1162 = vld [vmem:[#allocation4 + $0x170] sm:$0xff]
    %v1163 = vld [vmem:[#allocation4 + $0x178] sm:$0xff]
    %1164 = vmatprep.subr.mxu0 0.0
    %1165 = vmatpush1.msra.mxu0 %v1148
    %1166 = vmatprep.subr.mxu0 0.0
    %1167 = vmatpush1.msra.mxu0 %v1149
    %1168 = vmatprep.subr.mxu0 0.0
    %1169 = vmatpush1.msra.mxu0 %v1150
    %1170 = vmatprep.subr.mxu0 0.0
    %1171 = vmatpush1.msra.mxu0 %v1151
    %1172 = vmatprep.subr.mxu0 0.0
    %1173 = vmatpush1.msra.mxu0 %v1152
    %1174 = vmatprep.subr.mxu0 0.0
    %1175 = vmatpush1.msra.mxu0 %v1153
    %1176 = vmatprep.subr.mxu0 0.0
    %1177 = vmatpush1.msra.mxu0 %v1154
    %1178 = vmatprep.subr.mxu0 0.0
    %1179 = vmatpush1.msra.mxu0 %v1155
    %1180 = vmatprep.subr.mxu0 0.0
    %1181 = vmatpush1.msra.mxu0 %v1156
    %1182 = vmatprep.subr.mxu0 0.0
    %1183 = vmatpush1.msra.mxu0 %v1157
    %1184 = vmatprep.subr.mxu0 0.0
    %1185 = vmatpush1.msra.mxu0 %v1158
    %1186 = vmatprep.subr.mxu0 0.0
    %1187 = vmatpush1.msra.mxu0 %v1159
    %1188 = vmatprep.subr.mxu0 0.0
    %1189 = vmatpush1.msra.mxu0 %v1160
    %1190 = vmatprep.subr.mxu0 0.0
    %1191 = vmatpush1.msra.mxu0 %v1161
    %1192 = vmatprep.subr.mxu0 0.0
    %1193 = vmatpush1.msra.mxu0 %v1162
    %1194 = vmatprep.subr.mxu0 0.0
    %1195 = vmatpush1.msra.mxu0 %v1163
    %1196 = vmatprep.subr.mxu0 0.0
    %1197 = vmatpush1.msra.mxu0 0.0
    %1198 = vmatprep.subr.mxu0 0.0
    %1199 = vmatpush1.msra.mxu0 0.0
    %1200 = vmatprep.subr.mxu0 0.0
    %1201 = vmatpush1.msra.mxu0 0.0
    %1202 = vmatprep.subr.mxu0 0.0
    %1203 = vmatpush1.msra.mxu0 0.0
    %1204 = vmatprep.subr.mxu0 0.0
    %1205 = vmatpush1.msra.mxu0 0.0
    %1206 = vmatprep.subr.mxu0 0.0
    %1207 = vmatpush1.msra.mxu0 0.0
    %1208 = vmatprep.subr.mxu0 0.0
    %1209 = vmatpush1.msra.mxu0 0.0
    %1210 = vmatprep.subr.mxu0 0.0
    %1211 = vmatpush1.msra.mxu0 0.0
    %1212 = vmatprep.subr.mxu0 0.0
    %1213 = vmatpush1.msra.mxu0 0.0
    %1214 = vmatprep.subr.mxu0 0.0
    %1215 = vmatpush1.msra.mxu0 0.0
    %1216 = vmatprep.subr.mxu0 0.0
    %1217 = vmatpush1.msra.mxu0 0.0
    %1218 = vmatprep.subr.mxu0 0.0
    %1219 = vmatpush1.msra.mxu0 0.0
    %1220 = vmatprep.subr.mxu0 0.0
    %1221 = vmatpush1.msra.mxu0 0.0
    %1222 = vmatprep.subr.mxu0 0.0
    %1223 = vmatpush1.msra.mxu0 0.0
    %1224 = vmatprep.subr.mxu0 0.0
    %1225 = vmatpush1.msra.mxu0 0.0
    %1226 = vmatprep.subr.mxu0 0.0
    %1227 = vmatpush1.msra.mxu0 0.0
    %1228 = vmatprep.mubr.f32.mxu0 0.0
    %1229 = vmatmul.mubr.f32.gmra.mrb[0].mxu0 %v1146
    %v1230 = vpop.f32.mrb[0].mxu0
    %v1231 = vadd.f32 0.0, %v1230
    %v1232 = vpop.f32.mrb[0].mxu0
    %1233 = vmatprep.mubr.f32.mxu0 0.0
    %1234 = vmatmul.mubr.f32.gmra.mrb[0].mxu0 %v1147
    %v1235 = vpop.f32.mrb[0].mxu0
    %v1236 = vadd.f32 0.0, %v1235
    %v1237 = vpop.f32.mrb[0].mxu0
    %1238 = vdwg.mxu0
    %v1239 = vadd.f32 %v1138, %v1231
    %v1240 = vadd.f32 %v1143, %v1236
    %v1241 = vld [vmem:[#allocation3 + $0x12] sm:$0xff]
    %v1242 = vld [vmem:[#allocation3 + $0x1a] sm:$0xff]
    %v1243 = vld [vmem:[#allocation3 + $0x13] sm:$0xff]
    %v1244 = vld [vmem:[#allocation3 + $0x1b] sm:$0xff]
    %1245 = vmatprep.subr.mxu0 0.0
    %1246 = vmatpush1.msra.mxu0 %v980
    %1247 = vmatprep.subr.mxu0 0.0
    %1248 = vmatpush1.msra.mxu0 %v981
    %1249 = vmatprep.subr.mxu0 0.0
    %1250 = vmatpush1.msra.mxu0 %v982
    %1251 = vmatprep.subr.mxu0 0.0
    %1252 = vmatpush1.msra.mxu0 %v983
    %1253 = vmatprep.subr.mxu0 0.0
    %1254 = vmatpush1.msra.mxu0 %v984
    %1255 = vmatprep.subr.mxu0 0.0
    %1256 = vmatpush1.msra.mxu0 %v985
    %1257 = vmatprep.subr.mxu0 0.0
    %1258 = vmatpush1.msra.mxu0 %v986
    %1259 = vmatprep.subr.mxu0 0.0
    %1260 = vmatpush1.msra.mxu0 %v987
    %1261 = vmatprep.subr.mxu0 0.0
    %1262 = vmatpush1.msra.mxu0 %v988
    %1263 = vmatprep.subr.mxu0 0.0
    %1264 = vmatpush1.msra.mxu0 %v989
    %1265 = vmatprep.subr.mxu0 0.0
    %1266 = vmatpush1.msra.mxu0 %v990
    %1267 = vmatprep.subr.mxu0 0.0
    %1268 = vmatpush1.msra.mxu0 %v991
    %1269 = vmatprep.subr.mxu0 0.0
    %1270 = vmatpush1.msra.mxu0 %v992
    %1271 = vmatprep.subr.mxu0 0.0
    %1272 = vmatpush1.msra.mxu0 %v993
    %1273 = vmatprep.subr.mxu0 0.0
    %1274 = vmatpush1.msra.mxu0 %v994
    %1275 = vmatprep.subr.mxu0 0.0
    %1276 = vmatpush1.msra.mxu0 %v995
    %1277 = vmatprep.subr.mxu0 0.0
    %1278 = vmatpush1.msra.mxu0 0.0
    %1279 = vmatprep.subr.mxu0 0.0
    %1280 = vmatpush1.msra.mxu0 0.0
    %1281 = vmatprep.subr.mxu0 0.0
    %1282 = vmatpush1.msra.mxu0 0.0
    %1283 = vmatprep.subr.mxu0 0.0
    %1284 = vmatpush1.msra.mxu0 0.0
    %1285 = vmatprep.subr.mxu0 0.0
    %1286 = vmatpush1.msra.mxu0 0.0
    %1287 = vmatprep.subr.mxu0 0.0
    %1288 = vmatpush1.msra.mxu0 0.0
    %1289 = vmatprep.subr.mxu0 0.0
    %1290 = vmatpush1.msra.mxu0 0.0
    %1291 = vmatprep.subr.mxu0 0.0
    %1292 = vmatpush1.msra.mxu0 0.0
    %1293 = vmatprep.subr.mxu0 0.0
    %1294 = vmatpush1.msra.mxu0 0.0
    %1295 = vmatprep.subr.mxu0 0.0
    %1296 = vmatpush1.msra.mxu0 0.0
    %1297 = vmatprep.subr.mxu0 0.0
    %1298 = vmatpush1.msra.mxu0 0.0
    %1299 = vmatprep.subr.mxu0 0.0
    %1300 = vmatpush1.msra.mxu0 0.0
    %1301 = vmatprep.subr.mxu0 0.0
    %1302 = vmatpush1.msra.mxu0 0.0
    %1303 = vmatprep.subr.mxu0 0.0
    %1304 = vmatpush1.msra.mxu0 0.0
    %1305 = vmatprep.subr.mxu0 0.0
    %1306 = vmatpush1.msra.mxu0 0.0
    %1307 = vmatprep.subr.mxu0 0.0
    %1308 = vmatpush1.msra.mxu0 0.0
    %1309 = vmatprep.mubr.f32.mxu0 0.0
    %1310 = vmatmul.mubr.f32.gmra.mrb[0].mxu0 %v1243
    %v1311 = vpop.f32.mrb[0].mxu0
    %v1312 = vadd.f32 0.0, %v1311
    %v1313 = vpop.f32.mrb[0].mxu0
    %1314 = vmatprep.mubr.f32.mxu0 0.0
    %1315 = vmatmul.mubr.f32.gmra.mrb[0].mxu0 %v1244
    %v1316 = vpop.f32.mrb[0].mxu0
    %v1317 = vadd.f32 0.0, %v1316
    %v1318 = vpop.f32.mrb[0].mxu0
    %1319 = vdwg.mxu0
    %1320 = vmatprep.subr.mxu0 0.0
    %1321 = vmatpush1.msra.mxu0 %v962
    %1322 = vmatprep.subr.mxu0 0.0
    %1323 = vmatpush1.msra.mxu0 %v963
    %1324 = vmatprep.subr.mxu0 0.0
    %1325 = vmatpush1.msra.mxu0 %v964
    %1326 = vmatprep.subr.mxu0 0.0
    %1327 = vmatpush1.msra.mxu0 %v965
    %1328 = vmatprep.subr.mxu0 0.0
    %1329 = vmatpush1.msra.mxu0 %v966
    %1330 = vmatprep.subr.mxu0 0.0
    %1331 = vmatpush1.msra.mxu0 %v967
    %1332 = vmatprep.subr.mxu0 0.0
    %1333 = vmatpush1.msra.mxu0 %v968
    %1334 = vmatprep.subr.mxu0 0.0
    %1335 = vmatpush1.msra.mxu0 %v969
    %1336 = vmatprep.subr.mxu0 0.0
    %1337 = vmatpush1.msra.mxu0 %v970
    %1338 = vmatprep.subr.mxu0 0.0
    %1339 = vmatpush1.msra.mxu0 %v971
    %1340 = vmatprep.subr.mxu0 0.0
    %1341 = vmatpush1.msra.mxu0 %v972
    %1342 = vmatprep.subr.mxu0 0.0
    %1343 = vmatpush1.msra.mxu0 %v973
    %1344 = vmatprep.subr.mxu0 0.0
    %1345 = vmatpush1.msra.mxu0 %v974
    %1346 = vmatprep.subr.mxu0 0.0
    %1347 = vmatpush1.msra.mxu0 %v975
    %1348 = vmatprep.subr.mxu0 0.0
    %1349 = vmatpush1.msra.mxu0 %v976
    %1350 = vmatprep.subr.mxu0 0.0
    %1351 = vmatpush1.msra.mxu0 %v977
    %1352 = vmatprep.subr.mxu0 0.0
    %1353 = vmatpush1.msra.mxu0 0.0
    %1354 = vmatprep.subr.mxu0 0.0
    %1355 = vmatpush1.msra.mxu0 0.0
    %1356 = vmatprep.subr.mxu0 0.0
    %1357 = vmatpush1.msra.mxu0 0.0
    %1358 = vmatprep.subr.mxu0 0.0
    %1359 = vmatpush1.msra.mxu0 0.0
    %1360 = vmatprep.subr.mxu0 0.0
    %1361 = vmatpush1.msra.mxu0 0.0
    %1362 = vmatprep.subr.mxu0 0.0
    %1363 = vmatpush1.msra.mxu0 0.0
    %1364 = vmatprep.subr.mxu0 0.0
    %1365 = vmatpush1.msra.mxu0 0.0
    %1366 = vmatprep.subr.mxu0 0.0
    %1367 = vmatpush1.msra.mxu0 0.0
    %1368 = vmatprep.subr.mxu0 0.0
    %1369 = vmatpush1.msra.mxu0 0.0
    %1370 = vmatprep.subr.mxu0 0.0
    %1371 = vmatpush1.msra.mxu0 0.0
    %1372 = vmatprep.subr.mxu0 0.0
    %1373 = vmatpush1.msra.mxu0 0.0
    %1374 = vmatprep.subr.mxu0 0.0
    %1375 = vmatpush1.msra.mxu0 0.0
    %1376 = vmatprep.subr.mxu0 0.0
    %1377 = vmatpush1.msra.mxu0 0.0
    %1378 = vmatprep.subr.mxu0 0.0
    %1379 = vmatpush1.msra.mxu0 0.0
    %1380 = vmatprep.subr.mxu0 0.0
    %1381 = vmatpush1.msra.mxu0 0.0
    %1382 = vmatprep.subr.mxu0 0.0
    %1383 = vmatpush1.msra.mxu0 0.0
    %1384 = vmatprep.mubr.f32.mxu0 0.0
    %1385 = vmatmul.mubr.f32.gmra.mrb[0].mxu0 %v1241
    %v1386 = vpop.f32.mrb[0].mxu0
    %v1387 = vadd.f32 %v1312, %v1386
    %v1388 = vpop.f32.mrb[0].mxu0
    %1389 = vmatprep.mubr.f32.mxu0 0.0
    %1390 = vmatmul.mubr.f32.gmra.mrb[0].mxu0 %v1242
    %v1391 = vpop.f32.mrb[0].mxu0
    %v1392 = vadd.f32 %v1317, %v1391
    %v1393 = vpop.f32.mrb[0].mxu0
    %1394 = vdwg.mxu0
    %v1395 = vld [vmem:[#allocation3 + $0x14] sm:$0xff]
    %v1396 = vld [vmem:[#allocation3 + $0x1c] sm:$0xff]
    %1397 = vmatprep.subr.mxu0 0.0
    %1398 = vmatpush1.msra.mxu0 %v1148
    %1399 = vmatprep.subr.mxu0 0.0
    %1400 = vmatpush1.msra.mxu0 %v1149
    %1401 = vmatprep.subr.mxu0 0.0
    %1402 = vmatpush1.msra.mxu0 %v1150
    %1403 = vmatprep.subr.mxu0 0.0
    %1404 = vmatpush1.msra.mxu0 %v1151
    %1405 = vmatprep.subr.mxu0 0.0
    %1406 = vmatpush1.msra.mxu0 %v1152
    %1407 = vmatprep.subr.mxu0 0.0
    %1408 = vmatpush1.msra.mxu0 %v1153
    %1409 = vmatprep.subr.mxu0 0.0
    %1410 = vmatpush1.msra.mxu0 %v1154
    %1411 = vmatprep.subr.mxu0 0.0
    %1412 = vmatpush1.msra.mxu0 %v1155
    %1413 = vmatprep.subr.mxu0 0.0
    %1414 = vmatpush1.msra.mxu0 %v1156
    %1415 = vmatprep.subr.mxu0 0.0
    %1416 = vmatpush1.msra.mxu0 %v1157
    %1417 = vmatprep.subr.mxu0 0.0
    %1418 = vmatpush1.msra.mxu0 %v1158
    %1419 = vmatprep.subr.mxu0 0.0
    %1420 = vmatpush1.msra.mxu0 %v1159
    %1421 = vmatprep.subr.mxu0 0.0
    %1422 = vmatpush1.msra.mxu0 %v1160
    %1423 = vmatprep.subr.mxu0 0.0
    %1424 = vmatpush1.msra.mxu0 %v1161
    %1425 = vmatprep.subr.mxu0 0.0
    %1426 = vmatpush1.msra.mxu0 %v1162
    %1427 = vmatprep.subr.mxu0 0.0
    %1428 = vmatpush1.msra.mxu0 %v1163
    %1429 = vmatprep.subr.mxu0 0.0
    %1430 = vmatpush1.msra.mxu0 0.0
    %1431 = vmatprep.subr.mxu0 0.0
    %1432 = vmatpush1.msra.mxu0 0.0
    %1433 = vmatprep.subr.mxu0 0.0
    %1434 = vmatpush1.msra.mxu0 0.0
    %1435 = vmatprep.subr.mxu0 0.0
    %1436 = vmatpush1.msra.mxu0 0.0
    %1437 = vmatprep.subr.mxu0 0.0
    %1438 = vmatpush1.msra.mxu0 0.0
    %1439 = vmatprep.subr.mxu0 0.0
    %1440 = vmatpush1.msra.mxu0 0.0
    %1441 = vmatprep.subr.mxu0 0.0
    %1442 = vmatpush1.msra.mxu0 0.0
    %1443 = vmatprep.subr.mxu0 0.0
    %1444 = vmatpush1.msra.mxu0 0.0
    %1445 = vmatprep.subr.mxu0 0.0
    %1446 = vmatpush1.msra.mxu0 0.0
    %1447 = vmatprep.subr.mxu0 0.0
    %1448 = vmatpush1.msra.mxu0 0.0
    %1449 = vmatprep.subr.mxu0 0.0
    %1450 = vmatpush1.msra.mxu0 0.0
    %1451 = vmatprep.subr.mxu0 0.0
    %1452 = vmatpush1.msra.mxu0 0.0
    %1453 = vmatprep.subr.mxu0 0.0
    %1454 = vmatpush1.msra.mxu0 0.0
    %1455 = vmatprep.subr.mxu0 0.0
    %1456 = vmatpush1.msra.mxu0 0.0
    %1457 = vmatprep.subr.mxu0 0.0
    %1458 = vmatpush1.msra.mxu0 0.0
    %1459 = vmatprep.subr.mxu0 0.0
    %1460 = vmatpush1.msra.mxu0 0.0
    %1461 = vmatprep.mubr.f32.mxu0 0.0
    %1462 = vmatmul.mubr.f32.gmra.mrb[0].mxu0 %v1395
    %v1463 = vpop.f32.mrb[0].mxu0
    %v1464 = vadd.f32 0.0, %v1463
    %v1465 = vpop.f32.mrb[0].mxu0
    %1466 = vmatprep.mubr.f32.mxu0 0.0
    %1467 = vmatmul.mubr.f32.gmra.mrb[0].mxu0 %v1396
    %v1468 = vpop.f32.mrb[0].mxu0
    %v1469 = vadd.f32 0.0, %v1468
    %v1470 = vpop.f32.mrb[0].mxu0
    %1471 = vdwg.mxu0
    %v1472 = vadd.f32 %v1387, %v1464
    %v1473 = vadd.f32 %v1392, %v1469
    %v1474 = vadd.f32 %v1239, %v1240
    %v1475 = vrot.slane %v1474, 4
    %v1476 = vadd.f32 %v1474, %v1475
    %v1477 = vrot.slane %v1476, 2
    %v1478 = vadd.f32 %v1476, %v1477
    %v1479 = vrot.slane %v1478, 1
    %v1480 = vadd.f32 %v1478, %v1479
    %v1481 = vadd.f32 %v1480, 0.0
    %v1482 = vmul.f32 %v1239, %v1239
    %v1483 = vmul.f32 %v1240, %v1240
    %v1484 = vadd.f32 %v1482, %v1483
    %v1485 = vrot.slane %v1484, 4
    %v1486 = vadd.f32 %v1484, %v1485
    %v1487 = vrot.slane %v1486, 2
    %v1488 = vadd.f32 %v1486, %v1487
    %v1489 = vrot.slane %v1488, 1
    %v1490 = vadd.f32 %v1488, %v1489
    %v1491 = vadd.f32 %v1490, 0.0
    %v1492 = vadd.f32 %v1472, %v1473
    %v1493 = vrot.slane %v1492, 4
    %v1494 = vadd.f32 %v1492, %v1493
    %v1495 = vrot.slane %v1494, 2
    %v1496 = vadd.f32 %v1494, %v1495
    %v1497 = vrot.slane %v1496, 1
    %v1498 = vadd.f32 %v1496, %v1497
    %v1499 = vadd.f32 %v1481, %v1498
    %v1500 = vmul.f32 %v1472, %v1472
    %v1501 = vmul.f32 %v1473, %v1473
    %v1502 = vadd.f32 %v1500, %v1501
    %v1503 = vrot.slane %v1502, 4
    %v1504 = vadd.f32 %v1502, %v1503
    %v1505 = vrot.slane %v1504, 2
    %v1506 = vadd.f32 %v1504, %v1505
    %v1507 = vrot.slane %v1506, 1
    %v1508 = vadd.f32 %v1506, %v1507
    %v1509 = vadd.f32 %v1491, %v1508
    %v1510 = vld [vmem:[%s7] sm:$0xff]
    %v1511 = vld [vmem:[%s7 + $0x8] sm:$0xff]
    %v1512 = vld [vmem:[%s7 + $0x10] sm:$0xff]
    %v1513 = vld [vmem:[%s7 + $0x18] sm:$0xff]
    %v1514 = vld [vmem:[%s7 + $0x20] sm:$0xff]
    %v1515 = vld [vmem:[%s7 + $0x28] sm:$0xff]
    %v1516 = vld [vmem:[%s7 + $0x30] sm:$0xff]
    %v1517 = vld [vmem:[%s7 + $0x38] sm:$0xff]
    %v1518 = vld [vmem:[%s7 + $0x40] sm:$0xff]
    %v1519 = vld [vmem:[%s7 + $0x48] sm:$0xff]
    %v1520 = vld [vmem:[%s7 + $0x50] sm:$0xff]
    %v1521 = vld [vmem:[%s7 + $0x58] sm:$0xff]
    %v1522 = vld [vmem:[%s7 + $0x60] sm:$0xff]
    %v1523 = vld [vmem:[%s7 + $0x68] sm:$0xff]
    %v1524 = vld [vmem:[%s7 + $0x70] sm:$0xff]
    %v1525 = vld [vmem:[%s7 + $0x78] sm:$0xff]
    %1526 = vmatprep.subr.mxu0 0.0
    %1527 = vmatpush1.msra.mxu0 %v1510
    %1528 = vmatprep.subr.mxu0 0.0
    %1529 = vmatpush1.msra.mxu0 %v1511
    %1530 = vmatprep.subr.mxu0 0.0
    %1531 = vmatpush1.msra.mxu0 %v1512
    %1532 = vmatprep.subr.mxu0 0.0
    %1533 = vmatpush1.msra.mxu0 %v1513
    %1534 = vmatprep.subr.mxu0 0.0
    %1535 = vmatpush1.msra.mxu0 %v1514
    %1536 = vmatprep.subr.mxu0 0.0
    %1537 = vmatpush1.msra.mxu0 %v1515
    %1538 = vmatprep.subr.mxu0 0.0
    %1539 = vmatpush1.msra.mxu0 %v1516
    %1540 = vmatprep.subr.mxu0 0.0
    %1541 = vmatpush1.msra.mxu0 %v1517
    %1542 = vmatprep.subr.mxu0 0.0
    %1543 = vmatpush1.msra.mxu0 %v1518
    %1544 = vmatprep.subr.mxu0 0.0
    %1545 = vmatpush1.msra.mxu0 %v1519
    %1546 = vmatprep.subr.mxu0 0.0
    %1547 = vmatpush1.msra.mxu0 %v1520
    %1548 = vmatprep.subr.mxu0 0.0
    %1549 = vmatpush1.msra.mxu0 %v1521
    %1550 = vmatprep.subr.mxu0 0.0
    %1551 = vmatpush1.msra.mxu0 %v1522
    %1552 = vmatprep.subr.mxu0 0.0
    %1553 = vmatpush1.msra.mxu0 %v1523
    %1554 = vmatprep.subr.mxu0 0.0
    %1555 = vmatpush1.msra.mxu0 %v1524
    %1556 = vmatprep.subr.mxu0 0.0
    %1557 = vmatpush1.msra.mxu0 %v1525
    %1558 = vmatprep.subr.mxu0 0.0
    %1559 = vmatpush1.msra.mxu0 0.0
    %1560 = vmatprep.subr.mxu0 0.0
    %1561 = vmatpush1.msra.mxu0 0.0
    %1562 = vmatprep.subr.mxu0 0.0
    %1563 = vmatpush1.msra.mxu0 0.0
    %1564 = vmatprep.subr.mxu0 0.0
    %1565 = vmatpush1.msra.mxu0 0.0
    %1566 = vmatprep.subr.mxu0 0.0
    %1567 = vmatpush1.msra.mxu0 0.0
    %1568 = vmatprep.subr.mxu0 0.0
    %1569 = vmatpush1.msra.mxu0 0.0
    %1570 = vmatprep.subr.mxu0 0.0
    %1571 = vmatpush1.msra.mxu0 0.0
    %1572 = vmatprep.subr.mxu0 0.0
    %1573 = vmatpush1.msra.mxu0 0.0
    %1574 = vmatprep.subr.mxu0 0.0
    %1575 = vmatpush1.msra.mxu0 0.0
    %1576 = vmatprep.subr.mxu0 0.0
    %1577 = vmatpush1.msra.mxu0 0.0
    %1578 = vmatprep.subr.mxu0 0.0
    %1579 = vmatpush1.msra.mxu0 0.0
    %1580 = vmatprep.subr.mxu0 0.0
    %1581 = vmatpush1.msra.mxu0 0.0
    %1582 = vmatprep.subr.mxu0 0.0
    %1583 = vmatpush1.msra.mxu0 0.0
    %1584 = vmatprep.subr.mxu0 0.0
    %1585 = vmatpush1.msra.mxu0 0.0
    %1586 = vmatprep.subr.mxu0 0.0
    %1587 = vmatpush1.msra.mxu0 0.0
    %1588 = vmatprep.subr.mxu0 0.0
    %1589 = vmatpush1.msra.mxu0 0.0
    %1590 = vmatprep.mubr.f32.mxu0 0.0
    %1591 = vmatmul.mubr.f32.gmra.mrb[0].mxu0 %v1499
    %v1592 = vpop.f32.mrb[0].mxu0
    %v1593 = vadd.f32 0.0, %v1592
    %v1594 = vpop.f32.mrb[0].mxu0
    %1595 = vdwg.mxu0
    %1596 = vmatprep.subr.mxu0 0.0
    %1597 = vmatpush1.msra.mxu0 %v1510
    %1598 = vmatprep.subr.mxu0 0.0
    %1599 = vmatpush1.msra.mxu0 %v1511
    %1600 = vmatprep.subr.mxu0 0.0
    %1601 = vmatpush1.msra.mxu0 %v1512
    %1602 = vmatprep.subr.mxu0 0.0
    %1603 = vmatpush1.msra.mxu0 %v1513
    %1604 = vmatprep.subr.mxu0 0.0
    %1605 = vmatpush1.msra.mxu0 %v1514
    %1606 = vmatprep.subr.mxu0 0.0
    %1607 = vmatpush1.msra.mxu0 %v1515
    %1608 = vmatprep.subr.mxu0 0.0
    %1609 = vmatpush1.msra.mxu0 %v1516
    %1610 = vmatprep.subr.mxu0 0.0
    %1611 = vmatpush1.msra.mxu0 %v1517
    %1612 = vmatprep.subr.mxu0 0.0
    %1613 = vmatpush1.msra.mxu0 %v1518
    %1614 = vmatprep.subr.mxu0 0.0
    %1615 = vmatpush1.msra.mxu0 %v1519
    %1616 = vmatprep.subr.mxu0 0.0
    %1617 = vmatpush1.msra.mxu0 %v1520
    %1618 = vmatprep.subr.mxu0 0.0
    %1619 = vmatpush1.msra.mxu0 %v1521
    %1620 = vmatprep.subr.mxu0 0.0
    %1621 = vmatpush1.msra.mxu0 %v1522
    %1622 = vmatprep.subr.mxu0 0.0
    %1623 = vmatpush1.msra.mxu0 %v1523
    %1624 = vmatprep.subr.mxu0 0.0
    %1625 = vmatpush1.msra.mxu0 %v1524
    %1626 = vmatprep.subr.mxu0 0.0
    %1627 = vmatpush1.msra.mxu0 %v1525
    %1628 = vmatprep.subr.mxu0 0.0
    %1629 = vmatpush1.msra.mxu0 0.0
    %1630 = vmatprep.subr.mxu0 0.0
    %1631 = vmatpush1.msra.mxu0 0.0
    %1632 = vmatprep.subr.mxu0 0.0
    %1633 = vmatpush1.msra.mxu0 0.0
    %1634 = vmatprep.subr.mxu0 0.0
    %1635 = vmatpush1.msra.mxu0 0.0
    %1636 = vmatprep.subr.mxu0 0.0
    %1637 = vmatpush1.msra.mxu0 0.0
    %1638 = vmatprep.subr.mxu0 0.0
    %1639 = vmatpush1.msra.mxu0 0.0
    %1640 = vmatprep.subr.mxu0 0.0
    %1641 = vmatpush1.msra.mxu0 0.0
    %1642 = vmatprep.subr.mxu0 0.0
    %1643 = vmatpush1.msra.mxu0 0.0
    %1644 = vmatprep.subr.mxu0 0.0
    %1645 = vmatpush1.msra.mxu0 0.0
    %1646 = vmatprep.subr.mxu0 0.0
    %1647 = vmatpush1.msra.mxu0 0.0
    %1648 = vmatprep.subr.mxu0 0.0
    %1649 = vmatpush1.msra.mxu0 0.0
    %1650 = vmatprep.subr.mxu0 0.0
    %1651 = vmatpush1.msra.mxu0 0.0
    %1652 = vmatprep.subr.mxu0 0.0
    %1653 = vmatpush1.msra.mxu0 0.0
    %1654 = vmatprep.subr.mxu0 0.0
    %1655 = vmatpush1.msra.mxu0 0.0
    %1656 = vmatprep.subr.mxu0 0.0
    %1657 = vmatpush1.msra.mxu0 0.0
    %1658 = vmatprep.subr.mxu0 0.0
    %1659 = vmatpush1.msra.mxu0 0.0
    %1660 = vmatprep.mubr.f32.mxu0 0.0
    %1661 = vmatmul.mubr.f32.gmra.mrb[0].mxu0 %v1509
    %v1662 = vpop.f32.mrb[0].mxu0
    %v1663 = vadd.f32 0.0, %v1662
    %v1664 = vpop.f32.mrb[0].mxu0
    %1665 = vdwg.mxu0
    %v1666 = vmul.f32 %v1593, 0.001953125
    %v1667 = vmul.f32 %v1663, 0.001953125
    %v1668 = vmul.f32 %v1666, %v1666
    %v1669 = vsub.f32 %v1667, %v1668
    %v1670 = vadd.f32 %v1669, 1e-05
    %v1671 = vrsqrt.pop %v1670
    %v1672 = vld [vmem:[%s5] sm:$0x1]
    %v1673 = vmul.f32 %v1672, %v1671
    %v1674 = vld [vmem:[%s6] sm:$0x1]
    %v1675 = vmul.f32 %v1666, %v1673
    %v1676 = vsub.f32 %v1674, %v1675
    %v1677 = vld [vmem:[%s8] sm:$0xff]
    %v1679 = vsel %vm789, %v1673, 0
    %1681 = vmatprep.subr.mxu0 0.0
    %1682 = vmatpush1.msra.mxu0 %v1677
    %1683 = vmatprep.subr.mxu0 0.0
    %1684 = vmatpush1.msra.mxu0 0.0
    %1685 = vmatprep.subr.mxu0 0.0
    %1686 = vmatpush1.msra.mxu0 0.0
    %1687 = vmatprep.subr.mxu0 0.0
    %1688 = vmatpush1.msra.mxu0 0.0
    %1689 = vmatprep.subr.mxu0 0.0
    %1690 = vmatpush1.msra.mxu0 0.0
    %1691 = vmatprep.subr.mxu0 0.0
    %1692 = vmatpush1.msra.mxu0 0.0
    %1693 = vmatprep.subr.mxu0 0.0
    %1694 = vmatpush1.msra.mxu0 0.0
    %1695 = vmatprep.subr.mxu0 0.0
    %1696 = vmatpush1.msra.mxu0 0.0
    %1697 = vmatprep.subr.mxu0 0.0
    %1698 = vmatpush1.msra.mxu0 0.0
    %1699 = vmatprep.subr.mxu0 0.0
    %1700 = vmatpush1.msra.mxu0 0.0
    %1701 = vmatprep.subr.mxu0 0.0
    %1702 = vmatpush1.msra.mxu0 0.0
    %1703 = vmatprep.subr.mxu0 0.0
    %1704 = vmatpush1.msra.mxu0 0.0
    %1705 = vmatprep.subr.mxu0 0.0
    %1706 = vmatpush1.msra.mxu0 0.0
    %1707 = vmatprep.subr.mxu0 0.0
    %1708 = vmatpush1.msra.mxu0 0.0
    %1709 = vmatprep.subr.mxu0 0.0
    %1710 = vmatpush1.msra.mxu0 0.0
    %1711 = vmatprep.subr.mxu0 0.0
    %1712 = vmatpush1.msra.mxu0 0.0
    %1713 = vmatprep.subr.mxu0 0.0
    %1714 = vmatpush1.msra.mxu0 0.0
    %1715 = vmatprep.subr.mxu0 0.0
    %1716 = vmatpush1.msra.mxu0 0.0
    %1717 = vmatprep.subr.mxu0 0.0
    %1718 = vmatpush1.msra.mxu0 0.0
    %1719 = vmatprep.subr.mxu0 0.0
    %1720 = vmatpush1.msra.mxu0 0.0
    %1721 = vmatprep.subr.mxu0 0.0
    %1722 = vmatpush1.msra.mxu0 0.0
    %1723 = vmatprep.subr.mxu0 0.0
    %1724 = vmatpush1.msra.mxu0 0.0
    %1725 = vmatprep.subr.mxu0 0.0
    %1726 = vmatpush1.msra.mxu0 0.0
    %1727 = vmatprep.subr.mxu0 0.0
    %1728 = vmatpush1.msra.mxu0 0.0
    %1729 = vmatprep.subr.mxu0 0.0
    %1730 = vmatpush1.msra.mxu0 0.0
    %1731 = vmatprep.subr.mxu0 0.0
    %1732 = vmatpush1.msra.mxu0 0.0
    %1733 = vmatprep.subr.mxu0 0.0
    %1734 = vmatpush1.msra.mxu0 0.0
    %1735 = vmatprep.subr.mxu0 0.0
    %1736 = vmatpush1.msra.mxu0 0.0
    %1737 = vmatprep.subr.mxu0 0.0
    %1738 = vmatpush1.msra.mxu0 0.0
    %1739 = vmatprep.subr.mxu0 0.0
    %1740 = vmatpush1.msra.mxu0 0.0
    %1741 = vmatprep.subr.mxu0 0.0
    %1742 = vmatpush1.msra.mxu0 0.0
    %1743 = vmatprep.subr.mxu0 0.0
    %1744 = vmatpush1.msra.mxu0 0.0
    %1745 = vmatprep.mubr.f32.mxu0 0.0
    %1746 = vmatmul.mubr.f32.gmra.mrb[0].mxu0 %v1679
    %v1747 = vpop.f32.mrb[0].mxu0
    %v1748 = vadd.f32 0.0, %v1747
    %v1749 = vpop.f32.mrb[0].mxu0
    %1750 = vdwg.mxu0
    %v1752 = vsel %vm789, %v1676, 0
    %1754 = vmatprep.subr.mxu0 0.0
    %1755 = vmatpush1.msra.mxu0 %v1677
    %1756 = vmatprep.subr.mxu0 0.0
    %1757 = vmatpush1.msra.mxu0 0.0
    %1758 = vmatprep.subr.mxu0 0.0
    %1759 = vmatpush1.msra.mxu0 0.0
    %1760 = vmatprep.subr.mxu0 0.0
    %1761 = vmatpush1.msra.mxu0 0.0
    %1762 = vmatprep.subr.mxu0 0.0
    %1763 = vmatpush1.msra.mxu0 0.0
    %1764 = vmatprep.subr.mxu0 0.0
    %1765 = vmatpush1.msra.mxu0 0.0
    %1766 = vmatprep.subr.mxu0 0.0
    %1767 = vmatpush1.msra.mxu0 0.0
    %1768 = vmatprep.subr.mxu0 0.0
    %1769 = vmatpush1.msra.mxu0 0.0
    %1770 = vmatprep.subr.mxu0 0.0
    %1771 = vmatpush1.msra.mxu0 0.0
    %1772 = vmatprep.subr.mxu0 0.0
    %1773 = vmatpush1.msra.mxu0 0.0
    %1774 = vmatprep.subr.mxu0 0.0
    %1775 = vmatpush1.msra.mxu0 0.0
    %1776 = vmatprep.subr.mxu0 0.0
    %1777 = vmatpush1.msra.mxu0 0.0
    %1778 = vmatprep.subr.mxu0 0.0
    %1779 = vmatpush1.msra.mxu0 0.0
    %1780 = vmatprep.subr.mxu0 0.0
    %1781 = vmatpush1.msra.mxu0 0.0
    %1782 = vmatprep.subr.mxu0 0.0
    %1783 = vmatpush1.msra.mxu0 0.0
    %1784 = vmatprep.subr.mxu0 0.0
    %1785 = vmatpush1.msra.mxu0 0.0
    %1786 = vmatprep.subr.mxu0 0.0
    %1787 = vmatpush1.msra.mxu0 0.0
    %1788 = vmatprep.subr.mxu0 0.0
    %1789 = vmatpush1.msra.mxu0 0.0
    %1790 = vmatprep.subr.mxu0 0.0
    %1791 = vmatpush1.msra.mxu0 0.0
    %1792 = vmatprep.subr.mxu0 0.0
    %1793 = vmatpush1.msra.mxu0 0.0
    %1794 = vmatprep.subr.mxu0 0.0
    %1795 = vmatpush1.msra.mxu0 0.0
    %1796 = vmatprep.subr.mxu0 0.0
    %1797 = vmatpush1.msra.mxu0 0.0
    %1798 = vmatprep.subr.mxu0 0.0
    %1799 = vmatpush1.msra.mxu0 0.0
    %1800 = vmatprep.subr.mxu0 0.0
    %1801 = vmatpush1.msra.mxu0 0.0
    %1802 = vmatprep.subr.mxu0 0.0
    %1803 = vmatpush1.msra.mxu0 0.0
    %1804 = vmatprep.subr.mxu0 0.0
    %1805 = vmatpush1.msra.mxu0 0.0
    %1806 = vmatprep.subr.mxu0 0.0
    %1807 = vmatpush1.msra.mxu0 0.0
    %1808 = vmatprep.subr.mxu0 0.0
    %1809 = vmatpush1.msra.mxu0 0.0
    %1810 = vmatprep.subr.mxu0 0.0
    %1811 = vmatpush1.msra.mxu0 0.0
    %1812 = vmatprep.subr.mxu0 0.0
    %1813 = vmatpush1.msra.mxu0 0.0
    %1814 = vmatprep.subr.mxu0 0.0
    %1815 = vmatpush1.msra.mxu0 0.0
    %1816 = vmatprep.subr.mxu0 0.0
    %1817 = vmatpush1.msra.mxu0 0.0
    %1818 = vmatprep.mubr.f32.mxu0 0.0
    %1819 = vmatmul.mubr.f32.gmra.mrb[0].mxu0 %v1752
    %v1820 = vpop.f32.mrb[0].mxu0
    %v1821 = vadd.f32 0.0, %v1820
    %v1822 = vpop.f32.mrb[0].mxu0
    %1823 = vdwg.mxu0
    %v1824 = vlaneseq
    %v1825 = vshrl.u32 %v1824, 7
    %v1826 = vsub.s32 0, %v1825
    %v1827 = vrot.slane %v1748, %v1826
    %v1828 = vmul.f32 %v1239, %v1827
    %v1829 = vmul.f32 %v1240, %v1827
    %v1830 = vlaneseq
    %v1831 = vshrl.u32 %v1830, 7
    %v1832 = vsub.s32 0, %v1831
    %v1833 = vrot.slane %v1821, %v1832
    %v1834 = vadd.f32 %v1828, %v1833
    %v1835 = vadd.f32 %v1829, %v1833
    %v1836 = vmax.f32 %v1834, 0.0
    %v1837 = vmax.f32 %v1835, 0.0
    %v1838 = vmul.f32 %v1472, %v1827
    %v1839 = vmul.f32 %v1473, %v1827
    %v1840 = vadd.f32 %v1838, %v1833
    %v1841 = vadd.f32 %v1839, %v1833
    %v1842 = vmax.f32 %v1840, 0.0
    %v1843 = vmax.f32 %v1841, 0.0
    %v1844 = vpack.c.bf16 %v1837, %v1836
    %v1846 = vunpack.c.l.b16 %v1844
    %v1847 = vunpack.c.h.b16 %v1844
    %v1848 = vpack.c.b16 %v1846, %v1846
    %v1849 = vpack.c.b16 %v1847, %v1847
    %1852 = vst [vmem:[#allocation7] sm:$0xf] %v1848
    %1853 = vst [vmem:[#allocation7 + $0x4] sm:$0xf] %v1849
    %v1854 = vpack.c.bf16 %v1843, %v1842
    %v1856 = vunpack.c.l.b16 %v1854
    %v1857 = vunpack.c.h.b16 %v1854
    %v1858 = vpack.c.b16 %v1856, %v1856
    %v1859 = vpack.c.b16 %v1857, %v1857
    %1862 = vst [vmem:[#allocation7 + $0x8] sm:$0xf] %v1858
    %1863 = vst [vmem:[#allocation7 + $0xc] sm:$0xf] %v1859
    // Predicated region
    $region42: #{tpu_custom_call.1} parent=1 // pred_check
      _
    $region43: #{tpu_custom_call.1} parent=1 // pred_check_branch
      %1865 = sbr.rel (0) target = $region45
    $region44: #{tpu_custom_call.1} parent=1 // pred_region
      %s1867 = ssub.s32 256, 256
      %1868 = vsyncadd [#allocation6], %s1867
      %s1869 = sshll.u32 [#allocation7], 4
      %s1870 = int_to_ptr.vmem [resolvable:$true] %s1869
      %1875 = dma.vmem_to_hbm [thread:$0]  %s1870, 256, %s9, [#allocation6], 64, 64, 4
    $region45: #{tpu_custom_call.1} parent=1 // pred_fallthru
      _
    // Predicated region
    $region46: #{tpu_custom_call.1} parent=1 // pred_check
      _
    $region47: #{tpu_custom_call.1} parent=1 // pred_check_branch
      %1877 = sbr.rel (0) target = $region49
    $region48: #{tpu_custom_call.1} parent=1 // pred_region
      %1878 = dma.done [#allocation6], 256
    $region49: #{tpu_custom_call.1} parent=1 // pred_fallthru
      _
    %1879 = vsyncpa [#allocation5], 1
    %1880 = vsyncpa [#allocation6], 1

</llo_original>
